<compile_context>
chip_gen: v7x
topology: tpu7x:2x2x1
jax: 0.10.0
libtpu: 0.0.40
codegen_flags: <defaults>
</compile_context>

<pallas_src>
import math

import jax
import jax.numpy as jnp
from jax import lax
from jax.experimental import pallas as pl
from jax.experimental.pallas import tpu as pltpu

_EPS = 1e-5  # PyTorch nn.LayerNorm default


def patch_merging_kernel(x_ref, wa_ref, wb_ref, bias_ref, o_ref):
    # x_ref:    (tr, 2, Wh, 2C)  merged-patch tile; [:,0] = [x0|x2], [:,1] = [x1|x3]
    # wa_ref:   (2C, 2C)  gamma-folded reduction weight rows for the [x0|x2] half
    # wb_ref:   (2C, 2C)  gamma-folded reduction weight rows for the [x1|x3] half
    # bias_ref: (1, 2C)   folded LayerNorm bias (beta @ W_t)
    # o_ref:    (tr, Wh, 2C)
    tr, _, wh, c2 = x_ref.shape
    rows = tr * wh

    x = x_ref[...]
    xa = x[:, 0, :, :].reshape(rows, c2).astype(jnp.float32)   # h-even half
    xb = x[:, 1, :, :].reshape(rows, c2).astype(jnp.float32)   # h-odd  half

    # LayerNorm statistics over the full 4C feature (split across both halves),
    # biased variance (PyTorch semantics), always in f32.
    inv_n = 1.0 / (2 * c2)
    mean = (jnp.sum(xa, axis=-1, keepdims=True)
            + jnp.sum(xb, axis=-1, keepdims=True)) * inv_n
    xca = xa - mean
    xcb = xb - mean
    var = (jnp.sum(xca * xca, axis=-1, keepdims=True)
           + jnp.sum(xcb * xcb, axis=-1, keepdims=True)) * inv_n
    inv = lax.rsqrt(var + _EPS)                                # EUP rsqrt

    # Reduction on the MXU in the weight's dtype, f32 accumulation.
    wa = wa_ref[...]
    wb = wb_ref[...]
    mm_dtype = wa.dtype
    y = jnp.dot((xca * inv).astype(mm_dtype), wa,
                preferred_element_type=jnp.float32)
    y = y + jnp.dot((xcb * inv).astype(mm_dtype), wb,
                    preferred_element_type=jnp.float32)
    y = y + bias_ref[...].astype(jnp.float32)
    o_ref[...] = y.astype(o_ref.dtype).reshape(tr, wh, c2)


def patch_merging_forward(x, gamma, beta, w_red, *,
                          rows_per_tile=1024,
                          vmem_budget_bytes=12 * 1024 * 1024):
    """PatchMerging forward.

    x:      (B, D, H, W, C)
    gamma:  (4C,)    LayerNorm weight
    beta:   (4C,)    LayerNorm bias
    w_red:  (2C, 4C) nn.Linear(4*dim, 2*dim, bias=False) weight (PyTorch layout)
    returns (B, D, ceil(H/2), ceil(W/2), 2C)
    """
    B, D, H, W, C = x.shape
    # Pad H/W to even (matches F.pad(x, (0,0, 0,W%2, 0,H%2))); only when odd.
    # TODO(synk): fold the (rare) odd-size pad into the kernel with masked loads.
    if (H % 2) or (W % 2):
        x = jnp.pad(x, ((0, 0), (0, 0), (0, H % 2), (0, W % 2), (0, 0)))
    Hp, Wp = x.shape[2], x.shape[3]
    Hh, Wh = Hp // 2, Wp // 2
    C2, C4 = 2 * C, 4 * C
    R = B * D * Hh

    # Free, contiguous reshape: (B,D,Hp,Wp,C) -> (R, 2, Wh, 2C).
    #   xr[r, hp, w2, :] = [x(..., 2*w2, :), x(..., 2*w2+1, :)] at h = 2*h2 + hp
    #   => hp=0 gives [x0|x2], hp=1 gives [x1|x3]  (permutation of [x0,x1,x2,x3]).
    xr = x.reshape(R, 2, Wh, C2)

    # Fold the LayerNorm affine into the reduction weight and permute its rows
    # to the in-kernel [x0, x2, x1, x3] feature order.
    # TODO(synk): in a real model do this fold/permute once at parameter init.
    perm = jnp.concatenate([jnp.arange(0 * C, 1 * C), jnp.arange(2 * C, 3 * C),
                            jnp.arange(1 * C, 2 * C), jnp.arange(3 * C, 4 * C)])
    w_t = w_red.T                                                   # (4C, 2C)
    w_fold = (gamma.astype(jnp.float32)[:, None]
              * w_t.astype(jnp.float32))[perm].astype(w_red.dtype)  # (4C, 2C)
    wa = w_fold[:C2]                                                # rows for [x0|x2]
    wb = w_fold[C2:]                                                # rows for [x1|x3]
    bias = (beta.astype(jnp.float32) @ w_t.astype(jnp.float32)).reshape(1, C2)

    # Row-tile selection: target `rows_per_tile` merged rows per grid step,
    # capped by a conservative VMEM budget (double-buffered in/out tiles plus
    # resident weight halves; stays inside v5e's 16 MiB default scoped VMEM and
    # v7x's 64 MiB chip) and capped so the "parallel" grid has >= 2 steps.
    x_isz = jnp.dtype(x.dtype).itemsize
    w_isz = jnp.dtype(w_red.dtype).itemsize
    w_resident = 2 * (C2 * C2) * w_isz * 2            # two halves, double-buffered
    per_r = 2 * (2 * Wh * C2 + Wh * C2) * x_isz       # dbl-buffered input + output per R-row
    avail = max(vmem_budget_bytes - w_resident, per_r)
    tr = max(1, rows_per_tile // max(Wh, 1))
    tr = max(1, min(tr, avail // per_r, R))
    if R >= 2:
        tr = min(tr, -(-R // 2))                      # ceil(R/2) -> >= 2 grid steps
    grid = (pl.cdiv(R, tr),)                          # ragged last block is masked

    out = pl.pallas_call(
        patch_merging_kernel,
        out_shape=jax.ShapeDtypeStruct((R, Wh, C2), x.dtype),
        grid_spec=pltpu.PrefetchScalarGridSpec(
            num_scalar_prefetch=0,
            grid=grid,
            in_specs=[
                # Streamed merged-patch tile: one fully contiguous DMA / step.
                # If a profile shows exposed DMA, sweep pipeline_mode=pl.Buffered(3).
                pl.BlockSpec((tr, 2, Wh, C2), lambda i: (i, 0, 0, 0)),
                pl.BlockSpec((C2, C2), lambda i: (0, 0)),   # WA (resident)
                pl.BlockSpec((C2, C2), lambda i: (0, 0)),   # WB (resident)
                pl.BlockSpec((1, C2), lambda i: (0, 0)),    # bias (resident)
            ],
            out_specs=pl.BlockSpec((tr, Wh, C2), lambda i: (i, 0, 0)),
        ),
        compiler_params=pltpu.CompilerParams(
            dimension_semantics=("parallel",),
        ),
    )(xr, wa, wb, bias)

    return out.reshape(B, D, Hh, Wh, C2)


def patch_merging_reference(x, gamma, beta, w_red):
    """Pure-JAX reference mirroring the PyTorch forward."""
    B, D, H, W, C = x.shape
    if (H % 2) or (W % 2):
        x = jnp.pad(x, ((0, 0), (0, 0), (0, H % 2), (0, W % 2), (0, 0)))
    x0 = x[:, :, 0::2, 0::2, :]
    x1 = x[:, :, 1::2, 0::2, :]
    x2 = x[:, :, 0::2, 1::2, :]
    x3 = x[:, :, 1::2, 1::2, :]
    xm = jnp.concatenate([x0, x1, x2, x3], axis=-1)
    mean = xm.mean(-1, keepdims=True)
    var = ((xm - mean) ** 2).mean(-1, keepdims=True)
    xn = (xm - mean) * lax.rsqrt(var + _EPS) * gamma + beta
    return jnp.einsum("bdhwk,ok->bdhwo", xn, w_red,
                      precision=lax.Precision.HIGHEST)


if __name__ == "__main__":
    key = jax.random.PRNGKey(0)

    # Test 1: even H/W (no pad), grid divides evenly.
    B, D, H, W, C = 2, 4, 16, 16, 64   # 4C=256, 2C=128 (lane-dense)
    k1, k2, k3, k4 = jax.random.split(key, 4)
    x = jax.random.normal(k1, (B, D, H, W, C), dtype=jnp.float32)
    gamma = 1.0 + 0.1 * jax.random.normal(k2, (4 * C,), dtype=jnp.float32)
    beta = 0.1 * jax.random.normal(k3, (4 * C,), dtype=jnp.float32)
    bound = 1.0 / math.sqrt(4 * C)
    w_red = jax.random.uniform(k4, (2 * C, 4 * C),
                               minval=-bound, maxval=bound, dtype=jnp.float32)

    y = jax.block_until_ready(patch_merging_forward(x, gamma, beta, w_red))
    y_ref = patch_merging_reference(x, gamma, beta, w_red)
    assert y.shape == (B, D, H // 2, W // 2, 2 * C), y.shape
    assert jnp.allclose(y, y_ref, atol=2e-2, rtol=2e-2), "mismatch vs reference (even case)"

    # Test 2: odd H (pad path) + ragged row count (partial last grid block).
    B2, D2, H2, W2, C2in = 1, 1, 9, 16, 64
    j1, j2, j3, j4 = jax.random.split(jax.random.PRNGKey(1), 4)
    x2t = jax.random.normal(j1, (B2, D2, H2, W2, C2in), dtype=jnp.float32)
    g2 = 1.0 + 0.1 * jax.random.normal(j2, (4 * C2in,), dtype=jnp.float32)
    b2 = 0.1 * jax.random.normal(j3, (4 * C2in,), dtype=jnp.float32)
    w2 = jax.random.uniform(j4, (2 * C2in, 4 * C2in),
                            minval=-bound, maxval=bound, dtype=jnp.float32)

    y2 = jax.block_until_ready(patch_merging_forward(x2t, g2, b2, w2))
    y2_ref = patch_merging_reference(x2t, g2, b2, w2)
    assert y2.shape == (B2, D2, (H2 + 1) // 2, W2 // 2, 2 * C2in), y2.shape
    assert jnp.allclose(y2, y2_ref, atol=2e-2, rtol=2e-2), "mismatch vs reference (odd/ragged case)"

    print("KERNEL_OK")
</pallas_src>

<mosaic_0001>
module attributes {stable_mosaic.version = 11 : i64} {
  func.func @patch_merging_kernel(%arg0: i32, %arg1: memref<32x2x8x128xf32, #tpu.memory_space<vmem>>, %arg2: memref<128x128xf32, #tpu.memory_space<vmem>>, %arg3: memref<128x128xf32, #tpu.memory_space<vmem>>, %arg4: memref<1x128xf32, #tpu.memory_space<vmem>>, %arg5: memref<32x8x128xf32, #tpu.memory_space<vmem>>) attributes {dimension_semantics = [#tpu.dimension_semantics<parallel>], iteration_bounds = array<i64: 2>, scalar_prefetch = 0 : i64, scratch_operands = 0 : i64, tpu.core_type = #tpu.core_type<tc>, window_params = [{transform_indices = @transform_0, window_bounds = array<i64: 32, 2, 8, 128>}, {pipeline_mode = #tpu.pipeline_mode<synchronous>, transform_indices = @transform_1, window_bounds = array<i64: 128, 128>}, {pipeline_mode = #tpu.pipeline_mode<synchronous>, transform_indices = @transform_2, window_bounds = array<i64: 128, 128>}, {pipeline_mode = #tpu.pipeline_mode<synchronous>, transform_indices = @transform_3, window_bounds = array<i64: 1, 128>}, {transform_indices = @transform_4, window_bounds = array<i64: 32, 8, 128>}]} {
    %c0 = arith.constant 0 : index
    %c0_0 = arith.constant 0 : index
    %c0_1 = arith.constant 0 : index
    %c0_2 = arith.constant 0 : index
    %0 = vector.load %arg1[%c0, %c0_0, %c0_1, %c0_2] : memref<32x2x8x128xf32, #tpu.memory_space<vmem>>, vector<32x2x8x128xf32>
    %1 = vector.extract_strided_slice %0 {offsets = [0, 0, 0, 0], sizes = [32, 1, 8, 128], strides = [1, 1, 1, 1]} : vector<32x2x8x128xf32> to vector<32x1x8x128xf32>
    %2 = vector.shape_cast %1 : vector<32x1x8x128xf32> to vector<32x8x128xf32>
    %3 = vector.shape_cast %2 : vector<32x8x128xf32> to vector<256x128xf32>
    %4 = vector.extract_strided_slice %0 {offsets = [0, 1, 0, 0], sizes = [32, 1, 8, 128], strides = [1, 1, 1, 1]} : vector<32x2x8x128xf32> to vector<32x1x8x128xf32>
    %5 = vector.shape_cast %4 : vector<32x1x8x128xf32> to vector<32x8x128xf32>
    %6 = vector.shape_cast %5 : vector<32x8x128xf32> to vector<256x128xf32>
    %cst = arith.constant dense<0.000000e+00> : vector<256xf32>
    %7 = vector.multi_reduction <add>, %3, %cst [1] : vector<256x128xf32> to vector<256xf32>
    %8 = vector.shape_cast %7 : vector<256xf32> to vector<256x1xf32>
    %cst_3 = arith.constant dense<0.000000e+00> : vector<256xf32>
    %9 = vector.multi_reduction <add>, %6, %cst_3 [1] : vector<256x128xf32> to vector<256xf32>
    %10 = vector.shape_cast %9 : vector<256xf32> to vector<256x1xf32>
    %11 = arith.addf %8, %10 : vector<256x1xf32>
    %cst_4 = arith.constant 3.906250e-03 : f32
    %12 = vector.broadcast %cst_4 : f32 to vector<256x1xf32>
    %13 = arith.mulf %11, %12 : vector<256x1xf32>
    %14 = vector.broadcast %13 : vector<256x1xf32> to vector<256x128xf32>
    %15 = arith.subf %3, %14 : vector<256x128xf32>
    %16 = vector.broadcast %13 : vector<256x1xf32> to vector<256x128xf32>
    %17 = arith.subf %6, %16 : vector<256x128xf32>
    %18 = arith.mulf %15, %15 : vector<256x128xf32>
    %cst_5 = arith.constant dense<0.000000e+00> : vector<256xf32>
    %19 = vector.multi_reduction <add>, %18, %cst_5 [1] : vector<256x128xf32> to vector<256xf32>
    %20 = vector.shape_cast %19 : vector<256xf32> to vector<256x1xf32>
    %21 = arith.mulf %17, %17 : vector<256x128xf32>
    %cst_6 = arith.constant dense<0.000000e+00> : vector<256xf32>
    %22 = vector.multi_reduction <add>, %21, %cst_6 [1] : vector<256x128xf32> to vector<256xf32>
    %23 = vector.shape_cast %22 : vector<256xf32> to vector<256x1xf32>
    %24 = arith.addf %20, %23 : vector<256x1xf32>
    %cst_7 = arith.constant 3.906250e-03 : f32
    %25 = vector.broadcast %cst_7 : f32 to vector<256x1xf32>
    %26 = arith.mulf %24, %25 : vector<256x1xf32>
    %cst_8 = arith.constant 9.99999974E-6 : f32
    %27 = vector.broadcast %cst_8 : f32 to vector<256x1xf32>
    %28 = arith.addf %26, %27 : vector<256x1xf32>
    %29 = math.rsqrt %28 : vector<256x1xf32>
    %c0_9 = arith.constant 0 : index
    %c0_10 = arith.constant 0 : index
    %30 = vector.load %arg2[%c0_9, %c0_10] : memref<128x128xf32, #tpu.memory_space<vmem>>, vector<128x128xf32>
    %c0_11 = arith.constant 0 : index
    %c0_12 = arith.constant 0 : index
    %31 = vector.load %arg3[%c0_11, %c0_12] : memref<128x128xf32, #tpu.memory_space<vmem>>, vector<128x128xf32>
    %32 = vector.broadcast %29 : vector<256x1xf32> to vector<256x128xf32>
    %33 = arith.mulf %15, %32 : vector<256x128xf32>
    %cst_13 = arith.constant dense<0.000000e+00> : vector<256x128xf32>
    %34 = tpu.matmul %33, %30, %cst_13 {dimension_numbers = #tpu.dot_dimension_numbers<[1], [0], [0], [1], [0, 0, 1, 1], [], []>} : vector<256x128xf32>, vector<128x128xf32>, vector<256x128xf32> -> vector<256x128xf32>
    %35 = vector.broadcast %29 : vector<256x1xf32> to vector<256x128xf32>
    %36 = arith.mulf %17, %35 : vector<256x128xf32>
    %cst_14 = arith.constant dense<0.000000e+00> : vector<256x128xf32>
    %37 = tpu.matmul %36, %31, %cst_14 {dimension_numbers = #tpu.dot_dimension_numbers<[1], [0], [0], [1], [0, 0, 1, 1], [], []>} : vector<256x128xf32>, vector<128x128xf32>, vector<256x128xf32> -> vector<256x128xf32>
    %38 = arith.addf %34, %37 : vector<256x128xf32>
    %c0_15 = arith.constant 0 : index
    %c0_16 = arith.constant 0 : index
    %39 = vector.load %arg4[%c0_15, %c0_16] : memref<1x128xf32, #tpu.memory_space<vmem>>, vector<1x128xf32>
    %40 = vector.broadcast %39 : vector<1x128xf32> to vector<256x128xf32>
    %41 = arith.addf %38, %40 : vector<256x128xf32>
    %42 = vector.shape_cast %41 : vector<256x128xf32> to vector<32x8x128xf32>
    %c0_17 = arith.constant 0 : index
    %c0_18 = arith.constant 0 : index
    %c0_19 = arith.constant 0 : index
    %43 = vector.load %arg5[%c0_17, %c0_18, %c0_19] : memref<32x8x128xf32, #tpu.memory_space<vmem>>, vector<32x8x128xf32>
    tpu.vector_store %arg5[%c0_17, %c0_18, %c0_19], %42 {strides = array<i32>} : memref<32x8x128xf32, #tpu.memory_space<vmem>>, vector<32x8x128xf32>,
    return
  }
  func.func @transform_0(%arg0: i32) -> (i32, i32, i32, i32) {
    %c0_i32 = arith.constant 0 : i32
    %c0_i32_0 = arith.constant 0 : i32
    %c0_i32_1 = arith.constant 0 : i32
    %c0_i32_2 = arith.constant 0 : i32
    return %arg0, %c0_i32, %c0_i32_0, %c0_i32_1 : i32, i32, i32, i32
  }
  func.func @transform_1(%arg0: i32) -> (i32, i32) {
    %c0_i32 = arith.constant 0 : i32
    %c0_i32_0 = arith.constant 0 : i32
    %c0_i32_1 = arith.constant 0 : i32
    return %c0_i32, %c0_i32_0 : i32, i32
  }
  func.func @transform_2(%arg0: i32) -> (i32, i32) {
    %c0_i32 = arith.constant 0 : i32
    %c0_i32_0 = arith.constant 0 : i32
    %c0_i32_1 = arith.constant 0 : i32
    return %c0_i32, %c0_i32_0 : i32, i32
  }
  func.func @transform_3(%arg0: i32) -> (i32, i32) {
    %c0_i32 = arith.constant 0 : i32
    %c0_i32_0 = arith.constant 0 : i32
    %c0_i32_1 = arith.constant 0 : i32
    return %c0_i32, %c0_i32_0 : i32, i32
  }
  func.func @transform_4(%arg0: i32) -> (i32, i32, i32) {
    %c0_i32 = arith.constant 0 : i32
    %c0_i32_0 = arith.constant 0 : i32
    %c0_i32_1 = arith.constant 0 : i32
    return %arg0, %c0_i32, %c0_i32_0 : i32, i32, i32
  }
}

</mosaic_0001>

<llo_original>
// kernel: tpu_custom_call.1
$region0: #{tpu_custom_call.1}
  #allocation0 [shape = 'u32[]', space=smem, size = 0x4, offset = 0x4, fixed_abs, tag = 'smem constant byte address 0x4 - core index']
  #allocation1 [shape = 'u32[144,128]{1,0:T(1,128)}', space=vmem, size = 0x12000, scoped, tag = 'internal scratch']
  %s0 = inlined_call_operand.hbm [shape: f32[64,2,8,128], index: 0, kind: input, shape index: {}]
  %s1 = inlined_call_operand.hbm [shape: f32[128,128], index: 1, kind: input, shape index: {}]
  %s2 = inlined_call_operand.hbm [shape: f32[128,128], index: 2, kind: input, shape index: {}]
  %s3 = inlined_call_operand.vmem [shape: f32[1,128], index: 3, kind: input, shape index: {}]
  %s4 = inlined_call_operand.hbm [shape: f32[64,8,128], index: 4, kind: output, shape index: {}]
  %s5 = sld [smem:[#allocation0]]
  $region61: #{tpu_custom_call.1} parent=0
    _
  %s7 = ssub.s32 1, %s5
  %s8 = scalar_select 0, %s7, %s5
  $region1: #{tpu_custom_call.1} parent=0
    #allocation2 [shape = 'u8[524288]{0}', space=vmem, size = 0x80000, scoped, tag = 'input window, operand 0']
    #allocation3 [shape = 's32[2]{0}', space=sflag, size = 0x8, scoped, tag = 'scoped memory for tpu_custom_call.1']
    #allocation4 [shape = 's32[2]{0}', space=sflag, size = 0x8, scoped, tag = 'scoped memory for tpu_custom_call.1']
    #allocation5 [shape = 'u8[65536]{0}', space=vmem, size = 0x10000, scoped, tag = 'input window, operand 1, single buffered']
    #allocation6 [shape = 's32[1]{0}', space=sflag, size = 0x4, scoped, tag = 'scoped memory for tpu_custom_call.1']
    #allocation7 [shape = 'u8[65536]{0}', space=vmem, size = 0x10000, scoped, tag = 'input window, operand 2, single buffered']
    #allocation8 [shape = 'u8[262144]{0}', space=vmem, size = 0x40000, scoped, tag = 'output window, operand 0']
    %9 = vsyncpa [#allocation3], 0
    %s10 = scalar_lea.sflag [#allocation3], 1
    %11 = vsyncpa %s10, 0
    %12 = vsyncpa [#allocation6], 0
    %13 = vsyncpa [#allocation4], 0
    %s14 = scalar_lea.sflag [#allocation4], 1
    %15 = vsyncpa %s14, 0
    loop: start=0, step=1, limit=4
    $region2: #{tpu_custom_call.1} parent=1 // loop_pre_header
      _
    $region3: #{tpu_custom_call.1} parent=1 // loop_header
      %s17 = sphi 0, %s21
      %p18 = scmp.ge.s32.totalorder %s17, 4
      %s27 = sphi 0, %s29
      %s30 = sphi 0, %s27
      %s31 = sphi 0, %s30
      %s47 = sphi 0, %s31
      %s51 = sphi 0, %s51
      %s53 = sphi 0, %s51
      %s54 = sphi 0, %s53
      %s68 = sphi 0, %s54
      %s72 = sphi 0, %s72
      %s74 = sphi 0, %s72
      %s75 = sphi 0, %s74
      %s89 = sphi 0, %s75
      %s93 = sphi 0, %s93
      %s95 = sphi 0, %s93
      %s96 = sphi 0, %s95
      %s110 = sphi 0, %s96
      %s116 = sphi 0, %s118
      %s119 = sphi 0, %s116
      %s120 = sphi 0, %s119
      %s136 = sphi 0, %s120
    $region4: #{tpu_custom_call.1} parent=1 // loop_header_branch
      %20 = sbr.rel (%p18) target = $region8
    $region5: #{tpu_custom_call.1} parent=1 // loop_body
      %s22 = ssub.s32 %s17, 1
      %s23 = ssub.s32 %s17, 2
      %s24 = sadd.s32 %s17, 1
      %s25 = ssub.s32 %s17, %s24
      %p26 = scmp.eq.s32.totalorder %s25, 0
      %s28 = sadd.s32 %s27, 1
      %s29 = scalar_select %p26, %s27, %s28
      %p32 = pneg %p26
      %p33 = scmp.eq.s32.totalorder %s17, 1
      %p34 = por %p32, %p33
      %p35 = scmp.ne.s32.totalorder %s27, %s30
      %p36 = scmp.eq.s32.totalorder %s17, 0
      %p37 = por %p35, %p36
      %p38 = scmp.ne.s32.totalorder %s27, %s30
      %p39 = scmp.eq.s32.totalorder %s22, 1
      %p40 = por %p38, %p39
      %p41 = scmp.ne.s32.totalorder %s30, %s31
      %p42 = scmp.eq.s32.totalorder %s22, 0
      %p43 = por %p41, %p42
      %p44 = scmp.ne.s32.totalorder %s30, %s31
      %p45 = scmp.eq.s32.totalorder %s23, 1
      %p46 = por %p44, %p45
      %p48 = scmp.ne.s32.totalorder %s31, %s47
      %p49 = scmp.eq.s32.totalorder %s23, 0
      %p50 = por %p48, %p49
      %s52 = sadd.s32 %s51, 1
      %p55 = scmp.eq.s32.totalorder %s17, 1
      %p56 = scmp.ne.s32.totalorder %s51, %s53
      %p57 = scmp.eq.s32.totalorder %s17, 0
      %p58 = por %p56, %p57
      %p59 = scmp.ne.s32.totalorder %s51, %s53
      %p60 = scmp.eq.s32.totalorder %s22, 1
      %p61 = por %p59, %p60
      %p62 = scmp.ne.s32.totalorder %s53, %s54
      %p63 = scmp.eq.s32.totalorder %s22, 0
      %p64 = por %p62, %p63
      %p65 = scmp.ne.s32.totalorder %s53, %s54
      %p66 = scmp.eq.s32.totalorder %s23, 1
      %p67 = por %p65, %p66
      %p69 = scmp.ne.s32.totalorder %s54, %s68
      %p70 = scmp.eq.s32.totalorder %s23, 0
      %p71 = por %p69, %p70
      %s73 = sadd.s32 %s72, 1
      %p76 = scmp.eq.s32.totalorder %s17, 1
      %p77 = scmp.ne.s32.totalorder %s72, %s74
      %p78 = scmp.eq.s32.totalorder %s17, 0
      %p79 = por %p77, %p78
      %p80 = scmp.ne.s32.totalorder %s72, %s74
      %p81 = scmp.eq.s32.totalorder %s22, 1
      %p82 = por %p80, %p81
      %p83 = scmp.ne.s32.totalorder %s74, %s75
      %p84 = scmp.eq.s32.totalorder %s22, 0
      %p85 = por %p83, %p84
      %p86 = scmp.ne.s32.totalorder %s74, %s75
      %p87 = scmp.eq.s32.totalorder %s23, 1
      %p88 = por %p86, %p87
      %p90 = scmp.ne.s32.totalorder %s75, %s89
      %p91 = scmp.eq.s32.totalorder %s23, 0
      %p92 = por %p90, %p91
      %s94 = sadd.s32 %s93, 1
      %p97 = scmp.eq.s32.totalorder %s17, 1
      %p98 = scmp.ne.s32.totalorder %s93, %s95
      %p99 = scmp.eq.s32.totalorder %s17, 0
      %p100 = por %p98, %p99
      %p101 = scmp.ne.s32.totalorder %s93, %s95
      %p102 = scmp.eq.s32.totalorder %s22, 1
      %p103 = por %p101, %p102
      %p104 = scmp.ne.s32.totalorder %s95, %s96
      %p105 = scmp.eq.s32.totalorder %s22, 0
      %p106 = por %p104, %p105
      %p107 = scmp.ne.s32.totalorder %s95, %s96
      %p108 = scmp.eq.s32.totalorder %s23, 1
      %p109 = por %p107, %p108
      %p111 = scmp.ne.s32.totalorder %s96, %s110
      %p112 = scmp.eq.s32.totalorder %s23, 0
      %p113 = por %p111, %p112
      %s114 = ssub.s32 %s17, %s24
      %p115 = scmp.eq.s32.totalorder %s114, 0
      %s117 = sadd.s32 %s116, 1
      %s118 = scalar_select %p115, %s116, %s117
      %p121 = pneg %p115
      %p122 = scmp.eq.s32.totalorder %s17, 1
      %p123 = por %p121, %p122
      %p124 = scmp.ne.s32.totalorder %s116, %s119
      %p125 = scmp.eq.s32.totalorder %s17, 0
      %p126 = por %p124, %p125
      %p127 = scmp.ne.s32.totalorder %s116, %s119
      %p128 = scmp.eq.s32.totalorder %s22, 1
      %p129 = por %p127, %p128
      %p130 = scmp.ne.s32.totalorder %s119, %s120
      %p131 = scmp.eq.s32.totalorder %s22, 0
      %p132 = por %p130, %p131
      %p133 = scmp.ne.s32.totalorder %s119, %s120
      %p134 = scmp.eq.s32.totalorder %s23, 1
      %p135 = por %p133, %p134
      %p137 = scmp.ne.s32.totalorder %s120, %s136
      %p138 = scmp.eq.s32.totalorder %s23, 0
      %p139 = por %p137, %p138
      %p140 = scmp.le.s32.totalorder 1, %s17
      %p141 = scmp.lt.s32.totalorder %s17, 3
      %p142 = pnand %p140, %p141
      %p143 = pneg %p142
      // Predicated region
      $region9: #{tpu_custom_call.1} parent=5 // pred_check
        _
      $region10: #{tpu_custom_call.1} parent=5 // pred_check_branch
        %145 = sbr.rel (%p142) target = $region12
      $region11: #{tpu_custom_call.1} parent=5 // pred_region
        %s146 = ssub.s32 %s17, 1
        // Predicated region
        $region13: #{tpu_custom_call.1} parent=11 // pred_check
          %p147 = pneg %p64
        $region14: #{tpu_custom_call.1} parent=11 // pred_check_branch
          %149 = sbr.rel (%p147) target = $region16
        $region15: #{tpu_custom_call.1} parent=11 // pred_region
          %s151 = ssub.s32 2048, 2048
          %152 = vsyncadd [#allocation6], %s151
          %s153 = sshll.u32 [#allocation5], 4
          %s154 = int_to_ptr.vmem [resolvable:$true] %s153
          %159 = dma.hbm_to_vmem [thread:$0]  %s1, 2048, %s154, [#allocation6], 128, 128, 8
        $region16: #{tpu_custom_call.1} parent=11 // pred_fallthru
          _
        // Predicated region
        $region17: #{tpu_custom_call.1} parent=11 // pred_check
          %p160 = pneg %p85
        $region18: #{tpu_custom_call.1} parent=11 // pred_check_branch
          %162 = sbr.rel (%p160) target = $region20
        $region19: #{tpu_custom_call.1} parent=11 // pred_region
          %s164 = ssub.s32 2048, 2048
          %165 = vsyncadd [#allocation6], %s164
          %s166 = sshll.u32 [#allocation7], 4
          %s167 = int_to_ptr.vmem [resolvable:$true] %s166
          %172 = dma.hbm_to_vmem [thread:$0]  %s2, 2048, %s167, [#allocation6], 128, 128, 8
        $region20: #{tpu_custom_call.1} parent=11 // pred_fallthru
          _
        // Predicated region
        $region21: #{tpu_custom_call.1} parent=11 // pred_check
          %p173 = pneg %p106
        $region22: #{tpu_custom_call.1} parent=11 // pred_check_branch
          %175 = sbr.rel (%p173) target = $region24
        $region23: #{tpu_custom_call.1} parent=11 // pred_region
          _
        $region24: #{tpu_custom_call.1} parent=11 // pred_fallthru
          _
      $region12: #{tpu_custom_call.1} parent=5 // pred_fallthru
        _
      %p176 = scmp.lt.s32.totalorder %s17, 2
      // Predicated region
      $region25: #{tpu_custom_call.1} parent=5 // pred_check
        %p177 = pneg %p176
      $region26: #{tpu_custom_call.1} parent=5 // pred_check_branch
        %179 = sbr.rel (%p177) target = $region28
      $region27: #{tpu_custom_call.1} parent=5 // pred_region
        // Predicated region
        $region29: #{tpu_custom_call.1} parent=27 // pred_check
          %p180 = pneg %p37
        $region30: #{tpu_custom_call.1} parent=27 // pred_check_branch
          %182 = sbr.rel (%p180) target = $region32
        $region31: #{tpu_custom_call.1} parent=27 // pred_region
          %s183 = sand.u32 %s27, 1
          %s184 = scalar_lea.sflag [#allocation3], %s183
          %s185 = sand.u32 %s27, 1
          %s186 = smul.addr %s185, 512
          %s187 = scalar_lea.vmem [#allocation2], %s186
          %s188 = smul.u32 32, %s17
          %s190 = ssub.s32 8192, 8192
          %191 = vsyncadd %s184, %s190
          %s192 = smul.addr %s188, 2
          %s193 = smul.addr %s192, 128
          %s194 = scalar_lea.hbm %s0, %s193
          %s195 = sshll.u32 %s187, 4
          %s196 = int_to_ptr.vmem [resolvable:$true] %s195
          %201 = dma.hbm_to_vmem [thread:$0]  %s194, 8192, %s196, %s184, 128, 128, 8
        $region32: #{tpu_custom_call.1} parent=27 // pred_fallthru
          _
      $region28: #{tpu_custom_call.1} parent=5 // pred_fallthru
        _
      %p202 = scmp.le.s32.totalorder 1, %s17
      %p203 = scmp.lt.s32.totalorder %s17, 3
      %p204 = pnand %p202, %p203
      %p205 = pneg %p204
      // Predicated region
      $region33: #{tpu_custom_call.1} parent=5 // pred_check
        _
      $region34: #{tpu_custom_call.1} parent=5 // pred_check_branch
        %207 = sbr.rel (%p204) target = $region36
      $region35: #{tpu_custom_call.1} parent=5 // pred_region
        %s208 = ssub.s32 %s17, 1
        %s209 = sand.u32 %s30, 1
        %s210 = scalar_lea.sflag [#allocation3], %s209
        %s211 = sand.u32 %s30, 1
        %s212 = smul.addr %s211, 512
        %s213 = scalar_lea.vmem [#allocation2], %s212
        // Predicated region
        $region37: #{tpu_custom_call.1} parent=35 // pred_check
          %p214 = pneg %p43
        $region38: #{tpu_custom_call.1} parent=35 // pred_check_branch
          %216 = sbr.rel (%p214) target = $region40
        $region39: #{tpu_custom_call.1} parent=35 // pred_region
          %217 = dma.done %s210, 8192
        $region40: #{tpu_custom_call.1} parent=35 // pred_fallthru
          _
        // Predicated region
        $region41: #{tpu_custom_call.1} parent=35 // pred_check
          %p218 = pneg %p64
        $region42: #{tpu_custom_call.1} parent=35 // pred_check_branch
          %220 = sbr.rel (%p218) target = $region44
        $region43: #{tpu_custom_call.1} parent=35 // pred_region
          %221 = dma.done [#allocation6], 2048
        $region44: #{tpu_custom_call.1} parent=35 // pred_fallthru
          _
        // Predicated region
        $region45: #{tpu_custom_call.1} parent=35 // pred_check
          %p222 = pneg %p85
        $region46: #{tpu_custom_call.1} parent=35 // pred_check_branch
          %224 = sbr.rel (%p222) target = $region48
        $region47: #{tpu_custom_call.1} parent=35 // pred_region
          %225 = dma.done [#allocation6], 2048
        $region48: #{tpu_custom_call.1} parent=35 // pred_fallthru
          _
        %s226 = sand.u32 %s30, 1
        %s227 = scalar_lea.sflag [#allocation3], %s226
        %s228 = sand.u32 %s30, 1
        %s229 = smul.addr %s228, 512
        %s230 = scalar_lea.vmem [#allocation2], %s229
        %p231 = pneg %p43
        %p232 = pneg %p40
        %p233 = pneg %p64
        %p234 = pneg %p61
        %p235 = pneg %p85
        %p236 = pneg %p82
        %p237 = pneg %p106
        %p238 = pneg %p103
        %p239 = pneg %p132
        %p240 = pneg %p129
        %s241 = sand.u32 %s119, 1
        %s242 = scalar_lea.sflag [#allocation4], %s241
        %s243 = sand.u32 %s119, 1
        %s244 = smul.addr %s243, 256
        %s245 = scalar_lea.vmem [#allocation8], %s244
        %s246 = smul.u32 32, %s22
        %s247 = smul.u32 32, %s22
        %v248 = vld [vmem:[%s213] sm:$0xff]
        %v249 = vld [vmem:[%s213 + $0x8] sm:$0xff]
        %v250 = vld [vmem:[%s213 + $0x10] sm:$0xff]
        %v251 = vld [vmem:[%s213 + $0x18] sm:$0xff]
        %v252 = vld [vmem:[%s213 + $0x20] sm:$0xff]
        %v253 = vld [vmem:[%s213 + $0x28] sm:$0xff]
        %v254 = vld [vmem:[%s213 + $0x30] sm:$0xff]
        %v255 = vld [vmem:[%s213 + $0x38] sm:$0xff]
        %v256 = vld [vmem:[%s213 + $0x40] sm:$0xff]
        %v257 = vld [vmem:[%s213 + $0x48] sm:$0xff]
        %v258 = vld [vmem:[%s213 + $0x50] sm:$0xff]
        %v259 = vld [vmem:[%s213 + $0x58] sm:$0xff]
        %v260 = vld [vmem:[%s213 + $0x60] sm:$0xff]
        %v261 = vld [vmem:[%s213 + $0x68] sm:$0xff]
        %v262 = vld [vmem:[%s213 + $0x70] sm:$0xff]
        %v263 = vld [vmem:[%s213 + $0x78] sm:$0xff]
        %v264 = vld [vmem:[%s213 + $0x80] sm:$0xff]
        %v265 = vld [vmem:[%s213 + $0x88] sm:$0xff]
        %v266 = vld [vmem:[%s213 + $0x90] sm:$0xff]
        %v267 = vld [vmem:[%s213 + $0x98] sm:$0xff]
        %v268 = vld [vmem:[%s213 + $0xa0] sm:$0xff]
        %v269 = vld [vmem:[%s213 + $0xa8] sm:$0xff]
        %v270 = vld [vmem:[%s213 + $0xb0] sm:$0xff]
        %v271 = vld [vmem:[%s213 + $0xb8] sm:$0xff]
        %v272 = vld [vmem:[%s213 + $0xc0] sm:$0xff]
        %v273 = vld [vmem:[%s213 + $0xc8] sm:$0xff]
        %v274 = vld [vmem:[%s213 + $0xd0] sm:$0xff]
        %v275 = vld [vmem:[%s213 + $0xd8] sm:$0xff]
        %v276 = vld [vmem:[%s213 + $0xe0] sm:$0xff]
        %v277 = vld [vmem:[%s213 + $0xe8] sm:$0xff]
        %v278 = vld [vmem:[%s213 + $0xf0] sm:$0xff]
        %v279 = vld [vmem:[%s213 + $0xf8] sm:$0xff]
        %v280 = vld [vmem:[%s213 + $0x100] sm:$0xff]
        %v281 = vld [vmem:[%s213 + $0x108] sm:$0xff]
        %v282 = vld [vmem:[%s213 + $0x110] sm:$0xff]
        %v283 = vld [vmem:[%s213 + $0x118] sm:$0xff]
        %v284 = vld [vmem:[%s213 + $0x120] sm:$0xff]
        %v285 = vld [vmem:[%s213 + $0x128] sm:$0xff]
        %v286 = vld [vmem:[%s213 + $0x130] sm:$0xff]
        %v287 = vld [vmem:[%s213 + $0x138] sm:$0xff]
        %v288 = vld [vmem:[%s213 + $0x140] sm:$0xff]
        %v289 = vld [vmem:[%s213 + $0x148] sm:$0xff]
        %v290 = vld [vmem:[%s213 + $0x150] sm:$0xff]
        %v291 = vld [vmem:[%s213 + $0x158] sm:$0xff]
        %v292 = vld [vmem:[%s213 + $0x160] sm:$0xff]
        %v293 = vld [vmem:[%s213 + $0x168] sm:$0xff]
        %v294 = vld [vmem:[%s213 + $0x170] sm:$0xff]
        %v295 = vld [vmem:[%s213 + $0x178] sm:$0xff]
        %v296 = vld [vmem:[%s213 + $0x180] sm:$0xff]
        %v297 = vld [vmem:[%s213 + $0x188] sm:$0xff]
        %v298 = vld [vmem:[%s213 + $0x190] sm:$0xff]
        %v299 = vld [vmem:[%s213 + $0x198] sm:$0xff]
        %v300 = vld [vmem:[%s213 + $0x1a0] sm:$0xff]
        %v301 = vld [vmem:[%s213 + $0x1a8] sm:$0xff]
        %v302 = vld [vmem:[%s213 + $0x1b0] sm:$0xff]
        %v303 = vld [vmem:[%s213 + $0x1b8] sm:$0xff]
        %v304 = vld [vmem:[%s213 + $0x1c0] sm:$0xff]
        %v305 = vld [vmem:[%s213 + $0x1c8] sm:$0xff]
        %v306 = vld [vmem:[%s213 + $0x1d0] sm:$0xff]
        %v307 = vld [vmem:[%s213 + $0x1d8] sm:$0xff]
        %v308 = vld [vmem:[%s213 + $0x1e0] sm:$0xff]
        %v309 = vld [vmem:[%s213 + $0x1e8] sm:$0xff]
        %v310 = vld [vmem:[%s213 + $0x1f0] sm:$0xff]
        %v311 = vld [vmem:[%s213 + $0x1f8] sm:$0xff]
        %312 = vadd.xlane.f32.xlu0 %v248
        %v313 = vpop.xlane.xlu0 %312
        %314 = vadd.xlane.f32.xlu0 %v250
        %v315 = vpop.xlane.xlu0 %314
        %316 = vadd.xlane.f32.xlu0 %v252
        %v317 = vpop.xlane.xlu0 %316
        %318 = vadd.xlane.f32.xlu0 %v254
        %v319 = vpop.xlane.xlu0 %318
        %320 = vadd.xlane.f32.xlu0 %v256
        %v321 = vpop.xlane.xlu0 %320
        %322 = vadd.xlane.f32.xlu0 %v258
        %v323 = vpop.xlane.xlu0 %322
        %324 = vadd.xlane.f32.xlu0 %v260
        %v325 = vpop.xlane.xlu0 %324
        %326 = vadd.xlane.f32.xlu0 %v262
        %v327 = vpop.xlane.xlu0 %326
        %328 = vadd.xlane.f32.xlu0 %v264
        %v329 = vpop.xlane.xlu0 %328
        %330 = vadd.xlane.f32.xlu0 %v266
        %v331 = vpop.xlane.xlu0 %330
        %332 = vadd.xlane.f32.xlu0 %v268
        %v333 = vpop.xlane.xlu0 %332
        %334 = vadd.xlane.f32.xlu0 %v270
        %v335 = vpop.xlane.xlu0 %334
        %336 = vadd.xlane.f32.xlu0 %v272
        %v337 = vpop.xlane.xlu0 %336
        %338 = vadd.xlane.f32.xlu0 %v274
        %v339 = vpop.xlane.xlu0 %338
        %340 = vadd.xlane.f32.xlu0 %v276
        %v341 = vpop.xlane.xlu0 %340
        %342 = vadd.xlane.f32.xlu0 %v278
        %v343 = vpop.xlane.xlu0 %342
        %344 = vadd.xlane.f32.xlu0 %v280
        %v345 = vpop.xlane.xlu0 %344
        %346 = vadd.xlane.f32.xlu0 %v282
        %v347 = vpop.xlane.xlu0 %346
        %348 = vadd.xlane.f32.xlu0 %v284
        %v349 = vpop.xlane.xlu0 %348
        %350 = vadd.xlane.f32.xlu0 %v286
        %v351 = vpop.xlane.xlu0 %350
        %352 = vadd.xlane.f32.xlu0 %v288
        %v353 = vpop.xlane.xlu0 %352
        %354 = vadd.xlane.f32.xlu0 %v290
        %v355 = vpop.xlane.xlu0 %354
        %356 = vadd.xlane.f32.xlu0 %v292
        %v357 = vpop.xlane.xlu0 %356
        %358 = vadd.xlane.f32.xlu0 %v294
        %v359 = vpop.xlane.xlu0 %358
        %360 = vadd.xlane.f32.xlu0 %v296
        %v361 = vpop.xlane.xlu0 %360
        %362 = vadd.xlane.f32.xlu0 %v298
        %v363 = vpop.xlane.xlu0 %362
        %364 = vadd.xlane.f32.xlu0 %v300
        %v365 = vpop.xlane.xlu0 %364
        %366 = vadd.xlane.f32.xlu0 %v302
        %v367 = vpop.xlane.xlu0 %366
        %368 = vadd.xlane.f32.xlu0 %v304
        %v369 = vpop.xlane.xlu0 %368
        %370 = vadd.xlane.f32.xlu0 %v306
        %v371 = vpop.xlane.xlu0 %370
        %372 = vadd.xlane.f32.xlu0 %v308
        %v373 = vpop.xlane.xlu0 %372
        %374 = vadd.xlane.f32.xlu0 %v310
        %v375 = vpop.xlane.xlu0 %374
        %376 = vadd.xlane.f32.xlu0 %v249
        %v377 = vpop.xlane.xlu0 %376
        %378 = vadd.xlane.f32.xlu0 %v251
        %v379 = vpop.xlane.xlu0 %378
        %380 = vadd.xlane.f32.xlu0 %v253
        %v381 = vpop.xlane.xlu0 %380
        %382 = vadd.xlane.f32.xlu0 %v255
        %v383 = vpop.xlane.xlu0 %382
        %384 = vadd.xlane.f32.xlu0 %v257
        %v385 = vpop.xlane.xlu0 %384
        %386 = vadd.xlane.f32.xlu0 %v259
        %v387 = vpop.xlane.xlu0 %386
        %388 = vadd.xlane.f32.xlu0 %v261
        %v389 = vpop.xlane.xlu0 %388
        %390 = vadd.xlane.f32.xlu0 %v263
        %v391 = vpop.xlane.xlu0 %390
        %392 = vadd.xlane.f32.xlu0 %v265
        %v393 = vpop.xlane.xlu0 %392
        %394 = vadd.xlane.f32.xlu0 %v267
        %v395 = vpop.xlane.xlu0 %394
        %396 = vadd.xlane.f32.xlu0 %v269
        %v397 = vpop.xlane.xlu0 %396
        %398 = vadd.xlane.f32.xlu0 %v271
        %v399 = vpop.xlane.xlu0 %398
        %400 = vadd.xlane.f32.xlu0 %v273
        %v401 = vpop.xlane.xlu0 %400
        %402 = vadd.xlane.f32.xlu0 %v275
        %v403 = vpop.xlane.xlu0 %402
        %404 = vadd.xlane.f32.xlu0 %v277
        %v405 = vpop.xlane.xlu0 %404
        %406 = vadd.xlane.f32.xlu0 %v279
        %v407 = vpop.xlane.xlu0 %406
        %408 = vadd.xlane.f32.xlu0 %v281
        %v409 = vpop.xlane.xlu0 %408
        %410 = vadd.xlane.f32.xlu0 %v283
        %v411 = vpop.xlane.xlu0 %410
        %412 = vadd.xlane.f32.xlu0 %v285
        %v413 = vpop.xlane.xlu0 %412
        %414 = vadd.xlane.f32.xlu0 %v287
        %v415 = vpop.xlane.xlu0 %414
        %416 = vadd.xlane.f32.xlu0 %v289
        %v417 = vpop.xlane.xlu0 %416
        %418 = vadd.xlane.f32.xlu0 %v291
        %v419 = vpop.xlane.xlu0 %418
        %420 = vadd.xlane.f32.xlu0 %v293
        %v421 = vpop.xlane.xlu0 %420
        %422 = vadd.xlane.f32.xlu0 %v295
        %v423 = vpop.xlane.xlu0 %422
        %424 = vadd.xlane.f32.xlu0 %v297
        %v425 = vpop.xlane.xlu0 %424
        %426 = vadd.xlane.f32.xlu0 %v299
        %v427 = vpop.xlane.xlu0 %426
        %428 = vadd.xlane.f32.xlu0 %v301
        %v429 = vpop.xlane.xlu0 %428
        %430 = vadd.xlane.f32.xlu0 %v303
        %v431 = vpop.xlane.xlu0 %430
        %432 = vadd.xlane.f32.xlu0 %v305
        %v433 = vpop.xlane.xlu0 %432
        %434 = vadd.xlane.f32.xlu0 %v307
        %v435 = vpop.xlane.xlu0 %434
        %436 = vadd.xlane.f32.xlu0 %v309
        %v437 = vpop.xlane.xlu0 %436
        %438 = vadd.xlane.f32.xlu0 %v311
        %v439 = vpop.xlane.xlu0 %438
        %v440 = vadd.f32 %v313, %v377
        %v441 = vadd.f32 %v315, %v379
        %v442 = vadd.f32 %v317, %v381
        %v443 = vadd.f32 %v319, %v383
        %v444 = vadd.f32 %v321, %v385
        %v445 = vadd.f32 %v323, %v387
        %v446 = vadd.f32 %v325, %v389
        %v447 = vadd.f32 %v327, %v391
        %v448 = vadd.f32 %v329, %v393
        %v449 = vadd.f32 %v331, %v395
        %v450 = vadd.f32 %v333, %v397
        %v451 = vadd.f32 %v335, %v399
        %v452 = vadd.f32 %v337, %v401
        %v453 = vadd.f32 %v339, %v403
        %v454 = vadd.f32 %v341, %v405
        %v455 = vadd.f32 %v343, %v407
        %v456 = vadd.f32 %v345, %v409
        %v457 = vadd.f32 %v347, %v411
        %v458 = vadd.f32 %v349, %v413
        %v459 = vadd.f32 %v351, %v415
        %v460 = vadd.f32 %v353, %v417
        %v461 = vadd.f32 %v355, %v419
        %v462 = vadd.f32 %v357, %v421
        %v463 = vadd.f32 %v359, %v423
        %v464 = vadd.f32 %v361, %v425
        %v465 = vadd.f32 %v363, %v427
        %v466 = vadd.f32 %v365, %v429
        %v467 = vadd.f32 %v367, %v431
        %v468 = vadd.f32 %v369, %v433
        %v469 = vadd.f32 %v371, %v435
        %v470 = vadd.f32 %v373, %v437
        %v471 = vadd.f32 %v375, %v439
        %v472 = vmul.f32 %v440, 0.00390625
        %v473 = vmul.f32 %v441, 0.00390625
        %v474 = vmul.f32 %v442, 0.00390625
        %v475 = vmul.f32 %v443, 0.00390625
        %v476 = vmul.f32 %v444, 0.00390625
        %v477 = vmul.f32 %v445, 0.00390625
        %v478 = vmul.f32 %v446, 0.00390625
        %v479 = vmul.f32 %v447, 0.00390625
        %v480 = vmul.f32 %v448, 0.00390625
        %v481 = vmul.f32 %v449, 0.00390625
        %v482 = vmul.f32 %v450, 0.00390625
        %v483 = vmul.f32 %v451, 0.00390625
        %v484 = vmul.f32 %v452, 0.00390625
        %v485 = vmul.f32 %v453, 0.00390625
        %v486 = vmul.f32 %v454, 0.00390625
        %v487 = vmul.f32 %v455, 0.00390625
        %v488 = vmul.f32 %v456, 0.00390625
        %v489 = vmul.f32 %v457, 0.00390625
        %v490 = vmul.f32 %v458, 0.00390625
        %v491 = vmul.f32 %v459, 0.00390625
        %v492 = vmul.f32 %v460, 0.00390625
        %v493 = vmul.f32 %v461, 0.00390625
        %v494 = vmul.f32 %v462, 0.00390625
        %v495 = vmul.f32 %v463, 0.00390625
        %v496 = vmul.f32 %v464, 0.00390625
        %v497 = vmul.f32 %v465, 0.00390625
        %v498 = vmul.f32 %v466, 0.00390625
        %v499 = vmul.f32 %v467, 0.00390625
        %v500 = vmul.f32 %v468, 0.00390625
        %v501 = vmul.f32 %v469, 0.00390625
        %v502 = vmul.f32 %v470, 0.00390625
        %v503 = vmul.f32 %v471, 0.00390625
        %v504 = vsub.f32 %v248, %v472
        %v505 = vsub.f32 %v250, %v473
        %v506 = vsub.f32 %v252, %v474
        %v507 = vsub.f32 %v254, %v475
        %v508 = vsub.f32 %v256, %v476
        %v509 = vsub.f32 %v258, %v477
        %v510 = vsub.f32 %v260, %v478
        %v511 = vsub.f32 %v262, %v479
        %v512 = vsub.f32 %v264, %v480
        %v513 = vsub.f32 %v266, %v481
        %v514 = vsub.f32 %v268, %v482
        %v515 = vsub.f32 %v270, %v483
        %v516 = vsub.f32 %v272, %v484
        %v517 = vsub.f32 %v274, %v485
        %v518 = vsub.f32 %v276, %v486
        %v519 = vsub.f32 %v278, %v487
        %v520 = vsub.f32 %v280, %v488
        %v521 = vsub.f32 %v282, %v489
        %v522 = vsub.f32 %v284, %v490
        %v523 = vsub.f32 %v286, %v491
        %v524 = vsub.f32 %v288, %v492
        %v525 = vsub.f32 %v290, %v493
        %v526 = vsub.f32 %v292, %v494
        %v527 = vsub.f32 %v294, %v495
        %v528 = vsub.f32 %v296, %v496
        %v529 = vsub.f32 %v298, %v497
        %v530 = vsub.f32 %v300, %v498
        %v531 = vsub.f32 %v302, %v499
        %v532 = vsub.f32 %v304, %v500
        %v533 = vsub.f32 %v306, %v501
        %v534 = vsub.f32 %v308, %v502
        %v535 = vsub.f32 %v310, %v503
        %v536 = vsub.f32 %v249, %v472
        %v537 = vsub.f32 %v251, %v473
        %v538 = vsub.f32 %v253, %v474
        %v539 = vsub.f32 %v255, %v475
        %v540 = vsub.f32 %v257, %v476
        %v541 = vsub.f32 %v259, %v477
        %v542 = vsub.f32 %v261, %v478
        %v543 = vsub.f32 %v263, %v479
        %v544 = vsub.f32 %v265, %v480
        %v545 = vsub.f32 %v267, %v481
        %v546 = vsub.f32 %v269, %v482
        %v547 = vsub.f32 %v271, %v483
        %v548 = vsub.f32 %v273, %v484
        %v549 = vsub.f32 %v275, %v485
        %v550 = vsub.f32 %v277, %v486
        %v551 = vsub.f32 %v279, %v487
        %v552 = vsub.f32 %v281, %v488
        %v553 = vsub.f32 %v283, %v489
        %v554 = vsub.f32 %v285, %v490
        %v555 = vsub.f32 %v287, %v491
        %v556 = vsub.f32 %v289, %v492
        %v557 = vsub.f32 %v291, %v493
        %v558 = vsub.f32 %v293, %v494
        %v559 = vsub.f32 %v295, %v495
        %v560 = vsub.f32 %v297, %v496
        %v561 = vsub.f32 %v299, %v497
        %v562 = vsub.f32 %v301, %v498
        %v563 = vsub.f32 %v303, %v499
        %v564 = vsub.f32 %v305, %v500
        %v565 = vsub.f32 %v307, %v501
        %v566 = vsub.f32 %v309, %v502
        %v567 = vsub.f32 %v311, %v503
        %v568 = vmul.f32 %v504, %v504
        %v569 = vmul.f32 %v505, %v505
        %v570 = vmul.f32 %v506, %v506
        %v571 = vmul.f32 %v507, %v507
        %v572 = vmul.f32 %v508, %v508
        %v573 = vmul.f32 %v509, %v509
        %v574 = vmul.f32 %v510, %v510
        %v575 = vmul.f32 %v511, %v511
        %v576 = vmul.f32 %v512, %v512
        %v577 = vmul.f32 %v513, %v513
        %v578 = vmul.f32 %v514, %v514
        %v579 = vmul.f32 %v515, %v515
        %v580 = vmul.f32 %v516, %v516
        %v581 = vmul.f32 %v517, %v517
        %v582 = vmul.f32 %v518, %v518
        %v583 = vmul.f32 %v519, %v519
        %v584 = vmul.f32 %v520, %v520
        %v585 = vmul.f32 %v521, %v521
        %v586 = vmul.f32 %v522, %v522
        %v587 = vmul.f32 %v523, %v523
        %v588 = vmul.f32 %v524, %v524
        %v589 = vmul.f32 %v525, %v525
        %v590 = vmul.f32 %v526, %v526
        %v591 = vmul.f32 %v527, %v527
        %v592 = vmul.f32 %v528, %v528
        %v593 = vmul.f32 %v529, %v529
        %v594 = vmul.f32 %v530, %v530
        %v595 = vmul.f32 %v531, %v531
        %v596 = vmul.f32 %v532, %v532
        %v597 = vmul.f32 %v533, %v533
        %v598 = vmul.f32 %v534, %v534
        %v599 = vmul.f32 %v535, %v535
        %600 = vadd.xlane.f32.xlu0 %v568
        %v601 = vpop.xlane.xlu0 %600
        %602 = vadd.xlane.f32.xlu0 %v569
        %v603 = vpop.xlane.xlu0 %602
        %604 = vadd.xlane.f32.xlu0 %v570
        %v605 = vpop.xlane.xlu0 %604
        %606 = vadd.xlane.f32.xlu0 %v571
        %v607 = vpop.xlane.xlu0 %606
        %608 = vadd.xlane.f32.xlu0 %v572
        %v609 = vpop.xlane.xlu0 %608
        %610 = vadd.xlane.f32.xlu0 %v573
        %v611 = vpop.xlane.xlu0 %610
        %612 = vadd.xlane.f32.xlu0 %v574
        %v613 = vpop.xlane.xlu0 %612
        %614 = vadd.xlane.f32.xlu0 %v575
        %v615 = vpop.xlane.xlu0 %614
        %616 = vadd.xlane.f32.xlu0 %v576
        %v617 = vpop.xlane.xlu0 %616
        %618 = vadd.xlane.f32.xlu0 %v577
        %v619 = vpop.xlane.xlu0 %618
        %620 = vadd.xlane.f32.xlu0 %v578
        %v621 = vpop.xlane.xlu0 %620
        %622 = vadd.xlane.f32.xlu0 %v579
        %v623 = vpop.xlane.xlu0 %622
        %624 = vadd.xlane.f32.xlu0 %v580
        %v625 = vpop.xlane.xlu0 %624
        %626 = vadd.xlane.f32.xlu0 %v581
        %v627 = vpop.xlane.xlu0 %626
        %628 = vadd.xlane.f32.xlu0 %v582
        %v629 = vpop.xlane.xlu0 %628
        %630 = vadd.xlane.f32.xlu0 %v583
        %v631 = vpop.xlane.xlu0 %630
        %632 = vadd.xlane.f32.xlu0 %v584
        %v633 = vpop.xlane.xlu0 %632
        %634 = vadd.xlane.f32.xlu0 %v585
        %v635 = vpop.xlane.xlu0 %634
        %636 = vadd.xlane.f32.xlu0 %v586
        %v637 = vpop.xlane.xlu0 %636
        %638 = vadd.xlane.f32.xlu0 %v587
        %v639 = vpop.xlane.xlu0 %638
        %640 = vadd.xlane.f32.xlu0 %v588
        %v641 = vpop.xlane.xlu0 %640
        %642 = vadd.xlane.f32.xlu0 %v589
        %v643 = vpop.xlane.xlu0 %642
        %644 = vadd.xlane.f32.xlu0 %v590
        %v645 = vpop.xlane.xlu0 %644
        %646 = vadd.xlane.f32.xlu0 %v591
        %v647 = vpop.xlane.xlu0 %646
        %648 = vadd.xlane.f32.xlu0 %v592
        %v649 = vpop.xlane.xlu0 %648
        %650 = vadd.xlane.f32.xlu0 %v593
        %v651 = vpop.xlane.xlu0 %650
        %652 = vadd.xlane.f32.xlu0 %v594
        %v653 = vpop.xlane.xlu0 %652
        %654 = vadd.xlane.f32.xlu0 %v595
        %v655 = vpop.xlane.xlu0 %654
        %656 = vadd.xlane.f32.xlu0 %v596
        %v657 = vpop.xlane.xlu0 %656
        %658 = vadd.xlane.f32.xlu0 %v597
        %v659 = vpop.xlane.xlu0 %658
        %660 = vadd.xlane.f32.xlu0 %v598
        %v661 = vpop.xlane.xlu0 %660
        %662 = vadd.xlane.f32.xlu0 %v599
        %v663 = vpop.xlane.xlu0 %662
        %v664 = vmul.f32 %v536, %v536
        %v665 = vmul.f32 %v537, %v537
        %v666 = vmul.f32 %v538, %v538
        %v667 = vmul.f32 %v539, %v539
        %v668 = vmul.f32 %v540, %v540
        %v669 = vmul.f32 %v541, %v541
        %v670 = vmul.f32 %v542, %v542
        %v671 = vmul.f32 %v543, %v543
        %v672 = vmul.f32 %v544, %v544
        %v673 = vmul.f32 %v545, %v545
        %v674 = vmul.f32 %v546, %v546
        %v675 = vmul.f32 %v547, %v547
        %v676 = vmul.f32 %v548, %v548
        %v677 = vmul.f32 %v549, %v549
        %v678 = vmul.f32 %v550, %v550
        %v679 = vmul.f32 %v551, %v551
        %v680 = vmul.f32 %v552, %v552
        %v681 = vmul.f32 %v553, %v553
        %v682 = vmul.f32 %v554, %v554
        %v683 = vmul.f32 %v555, %v555
        %v684 = vmul.f32 %v556, %v556
        %v685 = vmul.f32 %v557, %v557
        %v686 = vmul.f32 %v558, %v558
        %v687 = vmul.f32 %v559, %v559
        %v688 = vmul.f32 %v560, %v560
        %v689 = vmul.f32 %v561, %v561
        %v690 = vmul.f32 %v562, %v562
        %v691 = vmul.f32 %v563, %v563
        %v692 = vmul.f32 %v564, %v564
        %v693 = vmul.f32 %v565, %v565
        %v694 = vmul.f32 %v566, %v566
        %v695 = vmul.f32 %v567, %v567
        %696 = vadd.xlane.f32.xlu0 %v664
        %v697 = vpop.xlane.xlu0 %696
        %698 = vadd.xlane.f32.xlu0 %v665
        %v699 = vpop.xlane.xlu0 %698
        %700 = vadd.xlane.f32.xlu0 %v666
        %v701 = vpop.xlane.xlu0 %700
        %702 = vadd.xlane.f32.xlu0 %v667
        %v703 = vpop.xlane.xlu0 %702
        %704 = vadd.xlane.f32.xlu0 %v668
        %v705 = vpop.xlane.xlu0 %704
        %706 = vadd.xlane.f32.xlu0 %v669
        %v707 = vpop.xlane.xlu0 %706
        %708 = vadd.xlane.f32.xlu0 %v670
        %v709 = vpop.xlane.xlu0 %708
        %710 = vadd.xlane.f32.xlu0 %v671
        %v711 = vpop.xlane.xlu0 %710
        %712 = vadd.xlane.f32.xlu0 %v672
        %v713 = vpop.xlane.xlu0 %712
        %714 = vadd.xlane.f32.xlu0 %v673
        %v715 = vpop.xlane.xlu0 %714
        %716 = vadd.xlane.f32.xlu0 %v674
        %v717 = vpop.xlane.xlu0 %716
        %718 = vadd.xlane.f32.xlu0 %v675
        %v719 = vpop.xlane.xlu0 %718
        %720 = vadd.xlane.f32.xlu0 %v676
        %v721 = vpop.xlane.xlu0 %720
        %722 = vadd.xlane.f32.xlu0 %v677
        %v723 = vpop.xlane.xlu0 %722
        %724 = vadd.xlane.f32.xlu0 %v678
        %v725 = vpop.xlane.xlu0 %724
        %726 = vadd.xlane.f32.xlu0 %v679
        %v727 = vpop.xlane.xlu0 %726
        %728 = vadd.xlane.f32.xlu0 %v680
        %v729 = vpop.xlane.xlu0 %728
        %730 = vadd.xlane.f32.xlu0 %v681
        %v731 = vpop.xlane.xlu0 %730
        %732 = vadd.xlane.f32.xlu0 %v682
        %v733 = vpop.xlane.xlu0 %732
        %734 = vadd.xlane.f32.xlu0 %v683
        %v735 = vpop.xlane.xlu0 %734
        %736 = vadd.xlane.f32.xlu0 %v684
        %v737 = vpop.xlane.xlu0 %736
        %738 = vadd.xlane.f32.xlu0 %v685
        %v739 = vpop.xlane.xlu0 %738
        %740 = vadd.xlane.f32.xlu0 %v686
        %v741 = vpop.xlane.xlu0 %740
        %742 = vadd.xlane.f32.xlu0 %v687
        %v743 = vpop.xlane.xlu0 %742
        %744 = vadd.xlane.f32.xlu0 %v688
        %v745 = vpop.xlane.xlu0 %744
        %746 = vadd.xlane.f32.xlu0 %v689
        %v747 = vpop.xlane.xlu0 %746
        %748 = vadd.xlane.f32.xlu0 %v690
        %v749 = vpop.xlane.xlu0 %748
        %750 = vadd.xlane.f32.xlu0 %v691
        %v751 = vpop.xlane.xlu0 %750
        %752 = vadd.xlane.f32.xlu0 %v692
        %v753 = vpop.xlane.xlu0 %752
        %754 = vadd.xlane.f32.xlu0 %v693
        %v755 = vpop.xlane.xlu0 %754
        %756 = vadd.xlane.f32.xlu0 %v694
        %v757 = vpop.xlane.xlu0 %756
        %758 = vadd.xlane.f32.xlu0 %v695
        %v759 = vpop.xlane.xlu0 %758
        %v760 = vadd.f32 %v601, %v697
        %v761 = vadd.f32 %v603, %v699
        %v762 = vadd.f32 %v605, %v701
        %v763 = vadd.f32 %v607, %v703
        %v764 = vadd.f32 %v609, %v705
        %v765 = vadd.f32 %v611, %v707
        %v766 = vadd.f32 %v613, %v709
        %v767 = vadd.f32 %v615, %v711
        %v768 = vadd.f32 %v617, %v713
        %v769 = vadd.f32 %v619, %v715
        %v770 = vadd.f32 %v621, %v717
        %v771 = vadd.f32 %v623, %v719
        %v772 = vadd.f32 %v625, %v721
        %v773 = vadd.f32 %v627, %v723
        %v774 = vadd.f32 %v629, %v725
        %v775 = vadd.f32 %v631, %v727
        %v776 = vadd.f32 %v633, %v729
        %v777 = vadd.f32 %v635, %v731
        %v778 = vadd.f32 %v637, %v733
        %v779 = vadd.f32 %v639, %v735
        %v780 = vadd.f32 %v641, %v737
        %v781 = vadd.f32 %v643, %v739
        %v782 = vadd.f32 %v645, %v741
        %v783 = vadd.f32 %v647, %v743
        %v784 = vadd.f32 %v649, %v745
        %v785 = vadd.f32 %v651, %v747
        %v786 = vadd.f32 %v653, %v749
        %v787 = vadd.f32 %v655, %v751
        %v788 = vadd.f32 %v657, %v753
        %v789 = vadd.f32 %v659, %v755
        %v790 = vadd.f32 %v661, %v757
        %v791 = vadd.f32 %v663, %v759
        %v792 = vmul.f32 %v760, 0.00390625
        %v793 = vmul.f32 %v761, 0.00390625
        %v794 = vmul.f32 %v762, 0.00390625
        %v795 = vmul.f32 %v763, 0.00390625
        %v796 = vmul.f32 %v764, 0.00390625
        %v797 = vmul.f32 %v765, 0.00390625
        %v798 = vmul.f32 %v766, 0.00390625
        %v799 = vmul.f32 %v767, 0.00390625
        %v800 = vmul.f32 %v768, 0.00390625
        %v801 = vmul.f32 %v769, 0.00390625
        %v802 = vmul.f32 %v770, 0.00390625
        %v803 = vmul.f32 %v771, 0.00390625
        %v804 = vmul.f32 %v772, 0.00390625
        %v805 = vmul.f32 %v773, 0.00390625
        %v806 = vmul.f32 %v774, 0.00390625
        %v807 = vmul.f32 %v775, 0.00390625
        %v808 = vmul.f32 %v776, 0.00390625
        %v809 = vmul.f32 %v777, 0.00390625
        %v810 = vmul.f32 %v778, 0.00390625
        %v811 = vmul.f32 %v779, 0.00390625
        %v812 = vmul.f32 %v780, 0.00390625
        %v813 = vmul.f32 %v781, 0.00390625
        %v814 = vmul.f32 %v782, 0.00390625
        %v815 = vmul.f32 %v783, 0.00390625
        %v816 = vmul.f32 %v784, 0.00390625
        %v817 = vmul.f32 %v785, 0.00390625
        %v818 = vmul.f32 %v786, 0.00390625
        %v819 = vmul.f32 %v787, 0.00390625
        %v820 = vmul.f32 %v788, 0.00390625
        %v821 = vmul.f32 %v789, 0.00390625
        %v822 = vmul.f32 %v790, 0.00390625
        %v823 = vmul.f32 %v791, 0.00390625
        %v824 = vadd.f32 %v792, 1e-05
        %v825 = vadd.f32 %v793, 1e-05
        %v826 = vadd.f32 %v794, 1e-05
        %v827 = vadd.f32 %v795, 1e-05
        %v828 = vadd.f32 %v796, 1e-05
        %v829 = vadd.f32 %v797, 1e-05
        %v830 = vadd.f32 %v798, 1e-05
        %v831 = vadd.f32 %v799, 1e-05
        %v832 = vadd.f32 %v800, 1e-05
        %v833 = vadd.f32 %v801, 1e-05
        %v834 = vadd.f32 %v802, 1e-05
        %v835 = vadd.f32 %v803, 1e-05
        %v836 = vadd.f32 %v804, 1e-05
        %v837 = vadd.f32 %v805, 1e-05
        %v838 = vadd.f32 %v806, 1e-05
        %v839 = vadd.f32 %v807, 1e-05
        %v840 = vadd.f32 %v808, 1e-05
        %v841 = vadd.f32 %v809, 1e-05
        %v842 = vadd.f32 %v810, 1e-05
        %v843 = vadd.f32 %v811, 1e-05
        %v844 = vadd.f32 %v812, 1e-05
        %v845 = vadd.f32 %v813, 1e-05
        %v846 = vadd.f32 %v814, 1e-05
        %v847 = vadd.f32 %v815, 1e-05
        %v848 = vadd.f32 %v816, 1e-05
        %v849 = vadd.f32 %v817, 1e-05
        %v850 = vadd.f32 %v818, 1e-05
        %v851 = vadd.f32 %v819, 1e-05
        %v852 = vadd.f32 %v820, 1e-05
        %v853 = vadd.f32 %v821, 1e-05
        %v854 = vadd.f32 %v822, 1e-05
        %v855 = vadd.f32 %v823, 1e-05
        %v856 = vrsqrt.pop %v824
        %v857 = vrsqrt.pop %v825
        %v858 = vrsqrt.pop %v826
        %v859 = vrsqrt.pop %v827
        %v860 = vrsqrt.pop %v828
        %v861 = vrsqrt.pop %v829
        %v862 = vrsqrt.pop %v830
        %v863 = vrsqrt.pop %v831
        %v864 = vrsqrt.pop %v832
        %v865 = vrsqrt.pop %v833
        %v866 = vrsqrt.pop %v834
        %v867 = vrsqrt.pop %v835
        %v868 = vrsqrt.pop %v836
        %v869 = vrsqrt.pop %v837
        %v870 = vrsqrt.pop %v838
        %v871 = vrsqrt.pop %v839
        %v872 = vrsqrt.pop %v840
        %v873 = vrsqrt.pop %v841
        %v874 = vrsqrt.pop %v842
        %v875 = vrsqrt.pop %v843
        %v876 = vrsqrt.pop %v844
        %v877 = vrsqrt.pop %v845
        %v878 = vrsqrt.pop %v846
        %v879 = vrsqrt.pop %v847
        %v880 = vrsqrt.pop %v848
        %v881 = vrsqrt.pop %v849
        %v882 = vrsqrt.pop %v850
        %v883 = vrsqrt.pop %v851
        %v884 = vrsqrt.pop %v852
        %v885 = vrsqrt.pop %v853
        %v886 = vrsqrt.pop %v854
        %v887 = vrsqrt.pop %v855
        %v888 = vld [vmem:[#allocation5] sm:$0xff]
        %v889 = vld [vmem:[#allocation5 + $0x8] sm:$0xff]
        %v890 = vld [vmem:[#allocation5 + $0x10] sm:$0xff]
        %v891 = vld [vmem:[#allocation5 + $0x18] sm:$0xff]
        %v892 = vld [vmem:[#allocation5 + $0x20] sm:$0xff]
        %v893 = vld [vmem:[#allocation5 + $0x28] sm:$0xff]
        %v894 = vld [vmem:[#allocation5 + $0x30] sm:$0xff]
        %v895 = vld [vmem:[#allocation5 + $0x38] sm:$0xff]
        %v896 = vld [vmem:[#allocation5 + $0x40] sm:$0xff]
        %v897 = vld [vmem:[#allocation5 + $0x48] sm:$0xff]
        %v898 = vld [vmem:[#allocation5 + $0x50] sm:$0xff]
        %v899 = vld [vmem:[#allocation5 + $0x58] sm:$0xff]
        %v900 = vld [vmem:[#allocation5 + $0x60] sm:$0xff]
        %v901 = vld [vmem:[#allocation5 + $0x68] sm:$0xff]
        %v902 = vld [vmem:[#allocation5 + $0x70] sm:$0xff]
        %v903 = vld [vmem:[#allocation5 + $0x78] sm:$0xff]
        %v904 = vld [vmem:[#allocation7] sm:$0xff]
        %v905 = vld [vmem:[#allocation7 + $0x8] sm:$0xff]
        %v906 = vld [vmem:[#allocation7 + $0x10] sm:$0xff]
        %v907 = vld [vmem:[#allocation7 + $0x18] sm:$0xff]
        %v908 = vld [vmem:[#allocation7 + $0x20] sm:$0xff]
        %v909 = vld [vmem:[#allocation7 + $0x28] sm:$0xff]
        %v910 = vld [vmem:[#allocation7 + $0x30] sm:$0xff]
        %v911 = vld [vmem:[#allocation7 + $0x38] sm:$0xff]
        %v912 = vld [vmem:[#allocation7 + $0x40] sm:$0xff]
        %v913 = vld [vmem:[#allocation7 + $0x48] sm:$0xff]
        %v914 = vld [vmem:[#allocation7 + $0x50] sm:$0xff]
        %v915 = vld [vmem:[#allocation7 + $0x58] sm:$0xff]
        %v916 = vld [vmem:[#allocation7 + $0x60] sm:$0xff]
        %v917 = vld [vmem:[#allocation7 + $0x68] sm:$0xff]
        %v918 = vld [vmem:[#allocation7 + $0x70] sm:$0xff]
        %v919 = vld [vmem:[#allocation7 + $0x78] sm:$0xff]
        %v920 = vmul.f32 %v504, %v856
        %v921 = vmul.f32 %v505, %v857
        %v922 = vmul.f32 %v506, %v858
        %v923 = vmul.f32 %v507, %v859
        %v924 = vmul.f32 %v508, %v860
        %v925 = vmul.f32 %v509, %v861
        %v926 = vmul.f32 %v510, %v862
        %v927 = vmul.f32 %v511, %v863
        %v928 = vmul.f32 %v512, %v864
        %v929 = vmul.f32 %v513, %v865
        %v930 = vmul.f32 %v514, %v866
        %v931 = vmul.f32 %v515, %v867
        %v932 = vmul.f32 %v516, %v868
        %v933 = vmul.f32 %v517, %v869
        %v934 = vmul.f32 %v518, %v870
        %v935 = vmul.f32 %v519, %v871
        %v936 = vmul.f32 %v520, %v872
        %v937 = vmul.f32 %v521, %v873
        %v938 = vmul.f32 %v522, %v874
        %v939 = vmul.f32 %v523, %v875
        %v940 = vmul.f32 %v524, %v876
        %v941 = vmul.f32 %v525, %v877
        %v942 = vmul.f32 %v526, %v878
        %v943 = vmul.f32 %v527, %v879
        %v944 = vmul.f32 %v528, %v880
        %v945 = vmul.f32 %v529, %v881
        %v946 = vmul.f32 %v530, %v882
        %v947 = vmul.f32 %v531, %v883
        %v948 = vmul.f32 %v532, %v884
        %v949 = vmul.f32 %v533, %v885
        %v950 = vmul.f32 %v534, %v886
        %v951 = vmul.f32 %v535, %v887
        %v952 = vmul.f32 %v536, %v856
        %v953 = vmul.f32 %v537, %v857
        %v954 = vmul.f32 %v538, %v858
        %v955 = vmul.f32 %v539, %v859
        %v956 = vmul.f32 %v540, %v860
        %v957 = vmul.f32 %v541, %v861
        %v958 = vmul.f32 %v542, %v862
        %v959 = vmul.f32 %v543, %v863
        %v960 = vmul.f32 %v544, %v864
        %v961 = vmul.f32 %v545, %v865
        %v962 = vmul.f32 %v546, %v866
        %v963 = vmul.f32 %v547, %v867
        %v964 = vmul.f32 %v548, %v868
        %v965 = vmul.f32 %v549, %v869
        %v966 = vmul.f32 %v550, %v870
        %v967 = vmul.f32 %v551, %v871
        %v968 = vmul.f32 %v552, %v872
        %v969 = vmul.f32 %v553, %v873
        %v970 = vmul.f32 %v554, %v874
        %v971 = vmul.f32 %v555, %v875
        %v972 = vmul.f32 %v556, %v876
        %v973 = vmul.f32 %v557, %v877
        %v974 = vmul.f32 %v558, %v878
        %v975 = vmul.f32 %v559, %v879
        %v976 = vmul.f32 %v560, %v880
        %v977 = vmul.f32 %v561, %v881
        %v978 = vmul.f32 %v562, %v882
        %v979 = vmul.f32 %v563, %v883
        %v980 = vmul.f32 %v564, %v884
        %v981 = vmul.f32 %v565, %v885
        %v982 = vmul.f32 %v566, %v886
        %v983 = vmul.f32 %v567, %v887
        %984 = vmatprep.subr.mxu0 0.0
        %985 = vmatpush1.msra.mxu0 %v904
        %986 = vmatprep.subr.mxu0 0.0
        %987 = vmatpush1.msra.mxu0 %v905
        %988 = vmatprep.subr.mxu0 0.0
        %989 = vmatpush1.msra.mxu0 %v906
        %990 = vmatprep.subr.mxu0 0.0
        %991 = vmatpush1.msra.mxu0 %v907
        %992 = vmatprep.subr.mxu0 0.0
        %993 = vmatpush1.msra.mxu0 %v908
        %994 = vmatprep.subr.mxu0 0.0
        %995 = vmatpush1.msra.mxu0 %v909
        %996 = vmatprep.subr.mxu0 0.0
        %997 = vmatpush1.msra.mxu0 %v910
        %998 = vmatprep.subr.mxu0 0.0
        %999 = vmatpush1.msra.mxu0 %v911
        %1000 = vmatprep.subr.mxu0 0.0
        %1001 = vmatpush1.msra.mxu0 %v912
        %1002 = vmatprep.subr.mxu0 0.0
        %1003 = vmatpush1.msra.mxu0 %v913
        %1004 = vmatprep.subr.mxu0 0.0
        %1005 = vmatpush1.msra.mxu0 %v914
        %1006 = vmatprep.subr.mxu0 0.0
        %1007 = vmatpush1.msra.mxu0 %v915
        %1008 = vmatprep.subr.mxu0 0.0
        %1009 = vmatpush1.msra.mxu0 %v916
        %1010 = vmatprep.subr.mxu0 0.0
        %1011 = vmatpush1.msra.mxu0 %v917
        %1012 = vmatprep.subr.mxu0 0.0
        %1013 = vmatpush1.msra.mxu0 %v918
        %1014 = vmatprep.subr.mxu0 0.0
        %1015 = vmatpush1.msra.mxu0 %v919
        %1016 = vmatprep.subr.mxu0 0.0
        %1017 = vmatpush1.msra.mxu0 0.0
        %1018 = vmatprep.subr.mxu0 0.0
        %1019 = vmatpush1.msra.mxu0 0.0
        %1020 = vmatprep.subr.mxu0 0.0
        %1021 = vmatpush1.msra.mxu0 0.0
        %1022 = vmatprep.subr.mxu0 0.0
        %1023 = vmatpush1.msra.mxu0 0.0
        %1024 = vmatprep.subr.mxu0 0.0
        %1025 = vmatpush1.msra.mxu0 0.0
        %1026 = vmatprep.subr.mxu0 0.0
        %1027 = vmatpush1.msra.mxu0 0.0
        %1028 = vmatprep.subr.mxu0 0.0
        %1029 = vmatpush1.msra.mxu0 0.0
        %1030 = vmatprep.subr.mxu0 0.0
        %1031 = vmatpush1.msra.mxu0 0.0
        %1032 = vmatprep.subr.mxu0 0.0
        %1033 = vmatpush1.msra.mxu0 0.0
        %1034 = vmatprep.subr.mxu0 0.0
        %1035 = vmatpush1.msra.mxu0 0.0
        %1036 = vmatprep.subr.mxu0 0.0
        %1037 = vmatpush1.msra.mxu0 0.0
        %1038 = vmatprep.subr.mxu0 0.0
        %1039 = vmatpush1.msra.mxu0 0.0
        %1040 = vmatprep.subr.mxu0 0.0
        %1041 = vmatpush1.msra.mxu0 0.0
        %1042 = vmatprep.subr.mxu0 0.0
        %1043 = vmatpush1.msra.mxu0 0.0
        %1044 = vmatprep.subr.mxu0 0.0
        %1045 = vmatpush1.msra.mxu0 0.0
        %1046 = vmatprep.subr.mxu0 0.0
        %1047 = vmatpush1.msra.mxu0 0.0
        %1048 = vmatprep.mubr.f32.mxu0 0.0
        %1049 = vmatmul.mubr.f32.gmra.mrb[0].mxu0 %v952
        %v1050 = vpop.f32.mrb[0].mxu0
        %v1051 = vadd.f32 0.0, %v1050
        %v1052 = vpop.f32.mrb[0].mxu0
        %1053 = vmatprep.mubr.f32.mxu0 0.0
        %1054 = vmatmul.mubr.f32.gmra.mrb[0].mxu0 %v953
        %v1055 = vpop.f32.mrb[0].mxu0
        %v1056 = vadd.f32 0.0, %v1055
        %v1057 = vpop.f32.mrb[0].mxu0
        %1058 = vmatprep.mubr.f32.mxu0 0.0
        %1059 = vmatmul.mubr.f32.gmra.mrb[0].mxu0 %v954
        %v1060 = vpop.f32.mrb[0].mxu0
        %v1061 = vadd.f32 0.0, %v1060
        %v1062 = vpop.f32.mrb[0].mxu0
        %1063 = vmatprep.mubr.f32.mxu0 0.0
        %1064 = vmatmul.mubr.f32.gmra.mrb[0].mxu0 %v955
        %v1065 = vpop.f32.mrb[0].mxu0
        %v1066 = vadd.f32 0.0, %v1065
        %v1067 = vpop.f32.mrb[0].mxu0
        %1068 = vmatprep.mubr.f32.mxu0 0.0
        %1069 = vmatmul.mubr.f32.gmra.mrb[0].mxu0 %v956
        %v1070 = vpop.f32.mrb[0].mxu0
        %v1071 = vadd.f32 0.0, %v1070
        %v1072 = vpop.f32.mrb[0].mxu0
        %1073 = vmatprep.mubr.f32.mxu0 0.0
        %1074 = vmatmul.mubr.f32.gmra.mrb[0].mxu0 %v957
        %v1075 = vpop.f32.mrb[0].mxu0
        %v1076 = vadd.f32 0.0, %v1075
        %v1077 = vpop.f32.mrb[0].mxu0
        %1078 = vmatprep.mubr.f32.mxu0 0.0
        %1079 = vmatmul.mubr.f32.gmra.mrb[0].mxu0 %v958
        %v1080 = vpop.f32.mrb[0].mxu0
        %v1081 = vadd.f32 0.0, %v1080
        %v1082 = vpop.f32.mrb[0].mxu0
        %1083 = vmatprep.mubr.f32.mxu0 0.0
        %1084 = vmatmul.mubr.f32.gmra.mrb[0].mxu0 %v959
        %v1085 = vpop.f32.mrb[0].mxu0
        %v1086 = vadd.f32 0.0, %v1085
        %v1087 = vpop.f32.mrb[0].mxu0
        %1088 = vmatprep.mubr.f32.mxu0 0.0
        %1089 = vmatmul.mubr.f32.gmra.mrb[0].mxu0 %v960
        %v1090 = vpop.f32.mrb[0].mxu0
        %v1091 = vadd.f32 0.0, %v1090
        %v1092 = vpop.f32.mrb[0].mxu0
        %1093 = vmatprep.mubr.f32.mxu0 0.0
        %1094 = vmatmul.mubr.f32.gmra.mrb[0].mxu0 %v961
        %v1095 = vpop.f32.mrb[0].mxu0
        %v1096 = vadd.f32 0.0, %v1095
        %v1097 = vpop.f32.mrb[0].mxu0
        %1098 = vmatprep.mubr.f32.mxu0 0.0
        %1099 = vmatmul.mubr.f32.gmra.mrb[0].mxu0 %v962
        %v1100 = vpop.f32.mrb[0].mxu0
        %v1101 = vadd.f32 0.0, %v1100
        %v1102 = vpop.f32.mrb[0].mxu0
        %1103 = vmatprep.mubr.f32.mxu0 0.0
        %1104 = vmatmul.mubr.f32.gmra.mrb[0].mxu0 %v963
        %v1105 = vpop.f32.mrb[0].mxu0
        %v1106 = vadd.f32 0.0, %v1105
        %v1107 = vpop.f32.mrb[0].mxu0
        %1108 = vmatprep.mubr.f32.mxu0 0.0
        %1109 = vmatmul.mubr.f32.gmra.mrb[0].mxu0 %v964
        %v1110 = vpop.f32.mrb[0].mxu0
        %v1111 = vadd.f32 0.0, %v1110
        %v1112 = vpop.f32.mrb[0].mxu0
        %1113 = vmatprep.mubr.f32.mxu0 0.0
        %1114 = vmatmul.mubr.f32.gmra.mrb[0].mxu0 %v965
        %v1115 = vpop.f32.mrb[0].mxu0
        %v1116 = vadd.f32 0.0, %v1115
        %v1117 = vpop.f32.mrb[0].mxu0
        %1118 = vmatprep.mubr.f32.mxu0 0.0
        %1119 = vmatmul.mubr.f32.gmra.mrb[0].mxu0 %v966
        %v1120 = vpop.f32.mrb[0].mxu0
        %v1121 = vadd.f32 0.0, %v1120
        %v1122 = vpop.f32.mrb[0].mxu0
        %1123 = vmatprep.mubr.f32.mxu0 0.0
        %1124 = vmatmul.mubr.f32.gmra.mrb[0].mxu0 %v967
        %v1125 = vpop.f32.mrb[0].mxu0
        %v1126 = vadd.f32 0.0, %v1125
        %v1127 = vpop.f32.mrb[0].mxu0
        %1128 = vmatprep.mubr.f32.mxu0 0.0
        %1129 = vmatmul.mubr.f32.gmra.mrb[0].mxu0 %v968
        %v1130 = vpop.f32.mrb[0].mxu0
        %v1131 = vadd.f32 0.0, %v1130
        %v1132 = vpop.f32.mrb[0].mxu0
        %1133 = vmatprep.mubr.f32.mxu0 0.0
        %1134 = vmatmul.mubr.f32.gmra.mrb[0].mxu0 %v969
        %v1135 = vpop.f32.mrb[0].mxu0
        %v1136 = vadd.f32 0.0, %v1135
        %v1137 = vpop.f32.mrb[0].mxu0
        %1138 = vmatprep.mubr.f32.mxu0 0.0
        %1139 = vmatmul.mubr.f32.gmra.mrb[0].mxu0 %v970
        %v1140 = vpop.f32.mrb[0].mxu0
        %v1141 = vadd.f32 0.0, %v1140
        %v1142 = vpop.f32.mrb[0].mxu0
        %1143 = vmatprep.mubr.f32.mxu0 0.0
        %1144 = vmatmul.mubr.f32.gmra.mrb[0].mxu0 %v971
        %v1145 = vpop.f32.mrb[0].mxu0
        %v1146 = vadd.f32 0.0, %v1145
        %v1147 = vpop.f32.mrb[0].mxu0
        %1148 = vmatprep.mubr.f32.mxu0 0.0
        %1149 = vmatmul.mubr.f32.gmra.mrb[0].mxu0 %v972
        %v1150 = vpop.f32.mrb[0].mxu0
        %v1151 = vadd.f32 0.0, %v1150
        %v1152 = vpop.f32.mrb[0].mxu0
        %1153 = vmatprep.mubr.f32.mxu0 0.0
        %1154 = vmatmul.mubr.f32.gmra.mrb[0].mxu0 %v973
        %v1155 = vpop.f32.mrb[0].mxu0
        %v1156 = vadd.f32 0.0, %v1155
        %v1157 = vpop.f32.mrb[0].mxu0
        %1158 = vmatprep.mubr.f32.mxu0 0.0
        %1159 = vmatmul.mubr.f32.gmra.mrb[0].mxu0 %v974
        %v1160 = vpop.f32.mrb[0].mxu0
        %v1161 = vadd.f32 0.0, %v1160
        %v1162 = vpop.f32.mrb[0].mxu0
        %1163 = vmatprep.mubr.f32.mxu0 0.0
        %1164 = vmatmul.mubr.f32.gmra.mrb[0].mxu0 %v975
        %v1165 = vpop.f32.mrb[0].mxu0
        %v1166 = vadd.f32 0.0, %v1165
        %v1167 = vpop.f32.mrb[0].mxu0
        %1168 = vmatprep.mubr.f32.mxu0 0.0
        %1169 = vmatmul.mubr.f32.gmra.mrb[0].mxu0 %v976
        %v1170 = vpop.f32.mrb[0].mxu0
        %v1171 = vadd.f32 0.0, %v1170
        %v1172 = vpop.f32.mrb[0].mxu0
        %1173 = vmatprep.mubr.f32.mxu0 0.0
        %1174 = vmatmul.mubr.f32.gmra.mrb[0].mxu0 %v977
        %v1175 = vpop.f32.mrb[0].mxu0
        %v1176 = vadd.f32 0.0, %v1175
        %v1177 = vpop.f32.mrb[0].mxu0
        %1178 = vmatprep.mubr.f32.mxu0 0.0
        %1179 = vmatmul.mubr.f32.gmra.mrb[0].mxu0 %v978
        %v1180 = vpop.f32.mrb[0].mxu0
        %v1181 = vadd.f32 0.0, %v1180
        %v1182 = vpop.f32.mrb[0].mxu0
        %1183 = vmatprep.mubr.f32.mxu0 0.0
        %1184 = vmatmul.mubr.f32.gmra.mrb[0].mxu0 %v979
        %v1185 = vpop.f32.mrb[0].mxu0
        %v1186 = vadd.f32 0.0, %v1185
        %v1187 = vpop.f32.mrb[0].mxu0
        %1188 = vmatprep.mubr.f32.mxu0 0.0
        %1189 = vmatmul.mubr.f32.gmra.mrb[0].mxu0 %v980
        %v1190 = vpop.f32.mrb[0].mxu0
        %v1191 = vadd.f32 0.0, %v1190
        %v1192 = vpop.f32.mrb[0].mxu0
        %1193 = vmatprep.mubr.f32.mxu0 0.0
        %1194 = vmatmul.mubr.f32.gmra.mrb[0].mxu0 %v981
        %v1195 = vpop.f32.mrb[0].mxu0
        %v1196 = vadd.f32 0.0, %v1195
        %v1197 = vpop.f32.mrb[0].mxu0
        %1198 = vmatprep.mubr.f32.mxu0 0.0
        %1199 = vmatmul.mubr.f32.gmra.mrb[0].mxu0 %v982
        %v1200 = vpop.f32.mrb[0].mxu0
        %v1201 = vadd.f32 0.0, %v1200
        %v1202 = vpop.f32.mrb[0].mxu0
        %1203 = vmatprep.mubr.f32.mxu0 0.0
        %1204 = vmatmul.mubr.f32.gmra.mrb[0].mxu0 %v983
        %v1205 = vpop.f32.mrb[0].mxu0
        %v1206 = vadd.f32 0.0, %v1205
        %v1207 = vpop.f32.mrb[0].mxu0
        %1208 = vdwg.mxu0
        %1209 = vmatprep.subr.mxu0 0.0
        %1210 = vmatpush1.msra.mxu0 %v888
        %1211 = vmatprep.subr.mxu0 0.0
        %1212 = vmatpush1.msra.mxu0 %v889
        %1213 = vmatprep.subr.mxu0 0.0
        %1214 = vmatpush1.msra.mxu0 %v890
        %1215 = vmatprep.subr.mxu0 0.0
        %1216 = vmatpush1.msra.mxu0 %v891
        %1217 = vmatprep.subr.mxu0 0.0
        %1218 = vmatpush1.msra.mxu0 %v892
        %1219 = vmatprep.subr.mxu0 0.0
        %1220 = vmatpush1.msra.mxu0 %v893
        %1221 = vmatprep.subr.mxu0 0.0
        %1222 = vmatpush1.msra.mxu0 %v894
        %1223 = vmatprep.subr.mxu0 0.0
        %1224 = vmatpush1.msra.mxu0 %v895
        %1225 = vmatprep.subr.mxu0 0.0
        %1226 = vmatpush1.msra.mxu0 %v896
        %1227 = vmatprep.subr.mxu0 0.0
        %1228 = vmatpush1.msra.mxu0 %v897
        %1229 = vmatprep.subr.mxu0 0.0
        %1230 = vmatpush1.msra.mxu0 %v898
        %1231 = vmatprep.subr.mxu0 0.0
        %1232 = vmatpush1.msra.mxu0 %v899
        %1233 = vmatprep.subr.mxu0 0.0
        %1234 = vmatpush1.msra.mxu0 %v900
        %1235 = vmatprep.subr.mxu0 0.0
        %1236 = vmatpush1.msra.mxu0 %v901
        %1237 = vmatprep.subr.mxu0 0.0
        %1238 = vmatpush1.msra.mxu0 %v902
        %1239 = vmatprep.subr.mxu0 0.0
        %1240 = vmatpush1.msra.mxu0 %v903
        %1241 = vmatprep.subr.mxu0 0.0
        %1242 = vmatpush1.msra.mxu0 0.0
        %1243 = vmatprep.subr.mxu0 0.0
        %1244 = vmatpush1.msra.mxu0 0.0
        %1245 = vmatprep.subr.mxu0 0.0
        %1246 = vmatpush1.msra.mxu0 0.0
        %1247 = vmatprep.subr.mxu0 0.0
        %1248 = vmatpush1.msra.mxu0 0.0
        %1249 = vmatprep.subr.mxu0 0.0
        %1250 = vmatpush1.msra.mxu0 0.0
        %1251 = vmatprep.subr.mxu0 0.0
        %1252 = vmatpush1.msra.mxu0 0.0
        %1253 = vmatprep.subr.mxu0 0.0
        %1254 = vmatpush1.msra.mxu0 0.0
        %1255 = vmatprep.subr.mxu0 0.0
        %1256 = vmatpush1.msra.mxu0 0.0
        %1257 = vmatprep.subr.mxu0 0.0
        %1258 = vmatpush1.msra.mxu0 0.0
        %1259 = vmatprep.subr.mxu0 0.0
        %1260 = vmatpush1.msra.mxu0 0.0
        %1261 = vmatprep.subr.mxu0 0.0
        %1262 = vmatpush1.msra.mxu0 0.0
        %1263 = vmatprep.subr.mxu0 0.0
        %1264 = vmatpush1.msra.mxu0 0.0
        %1265 = vmatprep.subr.mxu0 0.0
        %1266 = vmatpush1.msra.mxu0 0.0
        %1267 = vmatprep.subr.mxu0 0.0
        %1268 = vmatpush1.msra.mxu0 0.0
        %1269 = vmatprep.subr.mxu0 0.0
        %1270 = vmatpush1.msra.mxu0 0.0
        %1271 = vmatprep.subr.mxu0 0.0
        %1272 = vmatpush1.msra.mxu0 0.0
        %1273 = vmatprep.mubr.f32.mxu0 0.0
        %1274 = vmatmul.mubr.f32.gmra.mrb[0].mxu0 %v920
        %v1275 = vpop.f32.mrb[0].mxu0
        %v1276 = vadd.f32 %v1051, %v1275
        %v1277 = vpop.f32.mrb[0].mxu0
        %1278 = vmatprep.mubr.f32.mxu0 0.0
        %1279 = vmatmul.mubr.f32.gmra.mrb[0].mxu0 %v921
        %v1280 = vpop.f32.mrb[0].mxu0
        %v1281 = vadd.f32 %v1056, %v1280
        %v1282 = vpop.f32.mrb[0].mxu0
        %1283 = vmatprep.mubr.f32.mxu0 0.0
        %1284 = vmatmul.mubr.f32.gmra.mrb[0].mxu0 %v922
        %v1285 = vpop.f32.mrb[0].mxu0
        %v1286 = vadd.f32 %v1061, %v1285
        %v1287 = vpop.f32.mrb[0].mxu0
        %1288 = vmatprep.mubr.f32.mxu0 0.0
        %1289 = vmatmul.mubr.f32.gmra.mrb[0].mxu0 %v923
        %v1290 = vpop.f32.mrb[0].mxu0
        %v1291 = vadd.f32 %v1066, %v1290
        %v1292 = vpop.f32.mrb[0].mxu0
        %1293 = vmatprep.mubr.f32.mxu0 0.0
        %1294 = vmatmul.mubr.f32.gmra.mrb[0].mxu0 %v924
        %v1295 = vpop.f32.mrb[0].mxu0
        %v1296 = vadd.f32 %v1071, %v1295
        %v1297 = vpop.f32.mrb[0].mxu0
        %1298 = vmatprep.mubr.f32.mxu0 0.0
        %1299 = vmatmul.mubr.f32.gmra.mrb[0].mxu0 %v925
        %v1300 = vpop.f32.mrb[0].mxu0
        %v1301 = vadd.f32 %v1076, %v1300
        %v1302 = vpop.f32.mrb[0].mxu0
        %1303 = vmatprep.mubr.f32.mxu0 0.0
        %1304 = vmatmul.mubr.f32.gmra.mrb[0].mxu0 %v926
        %v1305 = vpop.f32.mrb[0].mxu0
        %v1306 = vadd.f32 %v1081, %v1305
        %v1307 = vpop.f32.mrb[0].mxu0
        %1308 = vmatprep.mubr.f32.mxu0 0.0
        %1309 = vmatmul.mubr.f32.gmra.mrb[0].mxu0 %v927
        %v1310 = vpop.f32.mrb[0].mxu0
        %v1311 = vadd.f32 %v1086, %v1310
        %v1312 = vpop.f32.mrb[0].mxu0
        %1313 = vmatprep.mubr.f32.mxu0 0.0
        %1314 = vmatmul.mubr.f32.gmra.mrb[0].mxu0 %v928
        %v1315 = vpop.f32.mrb[0].mxu0
        %v1316 = vadd.f32 %v1091, %v1315
        %v1317 = vpop.f32.mrb[0].mxu0
        %1318 = vmatprep.mubr.f32.mxu0 0.0
        %1319 = vmatmul.mubr.f32.gmra.mrb[0].mxu0 %v929
        %v1320 = vpop.f32.mrb[0].mxu0
        %v1321 = vadd.f32 %v1096, %v1320
        %v1322 = vpop.f32.mrb[0].mxu0
        %1323 = vmatprep.mubr.f32.mxu0 0.0
        %1324 = vmatmul.mubr.f32.gmra.mrb[0].mxu0 %v930
        %v1325 = vpop.f32.mrb[0].mxu0
        %v1326 = vadd.f32 %v1101, %v1325
        %v1327 = vpop.f32.mrb[0].mxu0
        %1328 = vmatprep.mubr.f32.mxu0 0.0
        %1329 = vmatmul.mubr.f32.gmra.mrb[0].mxu0 %v931
        %v1330 = vpop.f32.mrb[0].mxu0
        %v1331 = vadd.f32 %v1106, %v1330
        %v1332 = vpop.f32.mrb[0].mxu0
        %1333 = vmatprep.mubr.f32.mxu0 0.0
        %1334 = vmatmul.mubr.f32.gmra.mrb[0].mxu0 %v932
        %v1335 = vpop.f32.mrb[0].mxu0
        %v1336 = vadd.f32 %v1111, %v1335
        %v1337 = vpop.f32.mrb[0].mxu0
        %1338 = vmatprep.mubr.f32.mxu0 0.0
        %1339 = vmatmul.mubr.f32.gmra.mrb[0].mxu0 %v933
        %v1340 = vpop.f32.mrb[0].mxu0
        %v1341 = vadd.f32 %v1116, %v1340
        %v1342 = vpop.f32.mrb[0].mxu0
        %1343 = vmatprep.mubr.f32.mxu0 0.0
        %1344 = vmatmul.mubr.f32.gmra.mrb[0].mxu0 %v934
        %v1345 = vpop.f32.mrb[0].mxu0
        %v1346 = vadd.f32 %v1121, %v1345
        %v1347 = vpop.f32.mrb[0].mxu0
        %1348 = vmatprep.mubr.f32.mxu0 0.0
        %1349 = vmatmul.mubr.f32.gmra.mrb[0].mxu0 %v935
        %v1350 = vpop.f32.mrb[0].mxu0
        %v1351 = vadd.f32 %v1126, %v1350
        %v1352 = vpop.f32.mrb[0].mxu0
        %1353 = vmatprep.mubr.f32.mxu0 0.0
        %1354 = vmatmul.mubr.f32.gmra.mrb[0].mxu0 %v936
        %v1355 = vpop.f32.mrb[0].mxu0
        %v1356 = vadd.f32 %v1131, %v1355
        %v1357 = vpop.f32.mrb[0].mxu0
        %1358 = vmatprep.mubr.f32.mxu0 0.0
        %1359 = vmatmul.mubr.f32.gmra.mrb[0].mxu0 %v937
        %v1360 = vpop.f32.mrb[0].mxu0
        %v1361 = vadd.f32 %v1136, %v1360
        %v1362 = vpop.f32.mrb[0].mxu0
        %1363 = vmatprep.mubr.f32.mxu0 0.0
        %1364 = vmatmul.mubr.f32.gmra.mrb[0].mxu0 %v938
        %v1365 = vpop.f32.mrb[0].mxu0
        %v1366 = vadd.f32 %v1141, %v1365
        %v1367 = vpop.f32.mrb[0].mxu0
        %1368 = vmatprep.mubr.f32.mxu0 0.0
        %1369 = vmatmul.mubr.f32.gmra.mrb[0].mxu0 %v939
        %v1370 = vpop.f32.mrb[0].mxu0
        %v1371 = vadd.f32 %v1146, %v1370
        %v1372 = vpop.f32.mrb[0].mxu0
        %1373 = vmatprep.mubr.f32.mxu0 0.0
        %1374 = vmatmul.mubr.f32.gmra.mrb[0].mxu0 %v940
        %v1375 = vpop.f32.mrb[0].mxu0
        %v1376 = vadd.f32 %v1151, %v1375
        %v1377 = vpop.f32.mrb[0].mxu0
        %1378 = vmatprep.mubr.f32.mxu0 0.0
        %1379 = vmatmul.mubr.f32.gmra.mrb[0].mxu0 %v941
        %v1380 = vpop.f32.mrb[0].mxu0
        %v1381 = vadd.f32 %v1156, %v1380
        %v1382 = vpop.f32.mrb[0].mxu0
        %1383 = vmatprep.mubr.f32.mxu0 0.0
        %1384 = vmatmul.mubr.f32.gmra.mrb[0].mxu0 %v942
        %v1385 = vpop.f32.mrb[0].mxu0
        %v1386 = vadd.f32 %v1161, %v1385
        %v1387 = vpop.f32.mrb[0].mxu0
        %1388 = vmatprep.mubr.f32.mxu0 0.0
        %1389 = vmatmul.mubr.f32.gmra.mrb[0].mxu0 %v943
        %v1390 = vpop.f32.mrb[0].mxu0
        %v1391 = vadd.f32 %v1166, %v1390
        %v1392 = vpop.f32.mrb[0].mxu0
        %1393 = vmatprep.mubr.f32.mxu0 0.0
        %1394 = vmatmul.mubr.f32.gmra.mrb[0].mxu0 %v944
        %v1395 = vpop.f32.mrb[0].mxu0
        %v1396 = vadd.f32 %v1171, %v1395
        %v1397 = vpop.f32.mrb[0].mxu0
        %1398 = vmatprep.mubr.f32.mxu0 0.0
        %1399 = vmatmul.mubr.f32.gmra.mrb[0].mxu0 %v945
        %v1400 = vpop.f32.mrb[0].mxu0
        %v1401 = vadd.f32 %v1176, %v1400
        %v1402 = vpop.f32.mrb[0].mxu0
        %1403 = vmatprep.mubr.f32.mxu0 0.0
        %1404 = vmatmul.mubr.f32.gmra.mrb[0].mxu0 %v946
        %v1405 = vpop.f32.mrb[0].mxu0
        %v1406 = vadd.f32 %v1181, %v1405
        %v1407 = vpop.f32.mrb[0].mxu0
        %1408 = vmatprep.mubr.f32.mxu0 0.0
        %1409 = vmatmul.mubr.f32.gmra.mrb[0].mxu0 %v947
        %v1410 = vpop.f32.mrb[0].mxu0
        %v1411 = vadd.f32 %v1186, %v1410
        %v1412 = vpop.f32.mrb[0].mxu0
        %1413 = vmatprep.mubr.f32.mxu0 0.0
        %1414 = vmatmul.mubr.f32.gmra.mrb[0].mxu0 %v948
        %v1415 = vpop.f32.mrb[0].mxu0
        %v1416 = vadd.f32 %v1191, %v1415
        %v1417 = vpop.f32.mrb[0].mxu0
        %1418 = vmatprep.mubr.f32.mxu0 0.0
        %1419 = vmatmul.mubr.f32.gmra.mrb[0].mxu0 %v949
        %v1420 = vpop.f32.mrb[0].mxu0
        %v1421 = vadd.f32 %v1196, %v1420
        %v1422 = vpop.f32.mrb[0].mxu0
        %1423 = vmatprep.mubr.f32.mxu0 0.0
        %1424 = vmatmul.mubr.f32.gmra.mrb[0].mxu0 %v950
        %v1425 = vpop.f32.mrb[0].mxu0
        %v1426 = vadd.f32 %v1201, %v1425
        %v1427 = vpop.f32.mrb[0].mxu0
        %1428 = vmatprep.mubr.f32.mxu0 0.0
        %1429 = vmatmul.mubr.f32.gmra.mrb[0].mxu0 %v951
        %v1430 = vpop.f32.mrb[0].mxu0
        %v1431 = vadd.f32 %v1206, %v1430
        %v1432 = vpop.f32.mrb[0].mxu0
        %1433 = vdwg.mxu0
        %v1434 = vld [vmem:[%s3] sm:$0x1]
        %v1436 = vlaneseq
        %v1437 = vshrl.u32 %v1436, 7
        %v1438 = vsub.s32 0, %v1437
        %v1439 = vrot.slane %v1434, %v1438
        %v1441 = vadd.f32 %v1276, %v1439
        %v1442 = vadd.f32 %v1281, %v1439
        %v1443 = vadd.f32 %v1286, %v1439
        %v1444 = vadd.f32 %v1291, %v1439
        %v1445 = vadd.f32 %v1296, %v1439
        %v1446 = vadd.f32 %v1301, %v1439
        %v1447 = vadd.f32 %v1306, %v1439
        %v1448 = vadd.f32 %v1311, %v1439
        %v1449 = vadd.f32 %v1316, %v1439
        %v1450 = vadd.f32 %v1321, %v1439
        %v1451 = vadd.f32 %v1326, %v1439
        %v1452 = vadd.f32 %v1331, %v1439
        %v1453 = vadd.f32 %v1336, %v1439
        %v1454 = vadd.f32 %v1341, %v1439
        %v1455 = vadd.f32 %v1346, %v1439
        %v1456 = vadd.f32 %v1351, %v1439
        %v1457 = vadd.f32 %v1356, %v1439
        %v1458 = vadd.f32 %v1361, %v1439
        %v1459 = vadd.f32 %v1366, %v1439
        %v1460 = vadd.f32 %v1371, %v1439
        %v1461 = vadd.f32 %v1376, %v1439
        %v1462 = vadd.f32 %v1381, %v1439
        %v1463 = vadd.f32 %v1386, %v1439
        %v1464 = vadd.f32 %v1391, %v1439
        %v1465 = vadd.f32 %v1396, %v1439
        %v1466 = vadd.f32 %v1401, %v1439
        %v1467 = vadd.f32 %v1406, %v1439
        %v1468 = vadd.f32 %v1411, %v1439
        %v1469 = vadd.f32 %v1416, %v1439
        %v1470 = vadd.f32 %v1421, %v1439
        %v1471 = vadd.f32 %v1426, %v1439
        %v1472 = vadd.f32 %v1431, %v1439
        %1473 = vst [vmem:[%s245] sm:$0xff] %v1441
        %1474 = vst [vmem:[%s245 + $0x8] sm:$0xff] %v1442
        %1475 = vst [vmem:[%s245 + $0x10] sm:$0xff] %v1443
        %1476 = vst [vmem:[%s245 + $0x18] sm:$0xff] %v1444
        %1477 = vst [vmem:[%s245 + $0x20] sm:$0xff] %v1445
        %1478 = vst [vmem:[%s245 + $0x28] sm:$0xff] %v1446
        %1479 = vst [vmem:[%s245 + $0x30] sm:$0xff] %v1447
        %1480 = vst [vmem:[%s245 + $0x38] sm:$0xff] %v1448
        %1481 = vst [vmem:[%s245 + $0x40] sm:$0xff] %v1449
        %1482 = vst [vmem:[%s245 + $0x48] sm:$0xff] %v1450
        %1483 = vst [vmem:[%s245 + $0x50] sm:$0xff] %v1451
        %1484 = vst [vmem:[%s245 + $0x58] sm:$0xff] %v1452
        %1485 = vst [vmem:[%s245 + $0x60] sm:$0xff] %v1453
        %1486 = vst [vmem:[%s245 + $0x68] sm:$0xff] %v1454
        %1487 = vst [vmem:[%s245 + $0x70] sm:$0xff] %v1455
        %1488 = vst [vmem:[%s245 + $0x78] sm:$0xff] %v1456
        %1489 = vst [vmem:[%s245 + $0x80] sm:$0xff] %v1457
        %1490 = vst [vmem:[%s245 + $0x88] sm:$0xff] %v1458
        %1491 = vst [vmem:[%s245 + $0x90] sm:$0xff] %v1459
        %1492 = vst [vmem:[%s245 + $0x98] sm:$0xff] %v1460
        %1493 = vst [vmem:[%s245 + $0xa0] sm:$0xff] %v1461
        %1494 = vst [vmem:[%s245 + $0xa8] sm:$0xff] %v1462
        %1495 = vst [vmem:[%s245 + $0xb0] sm:$0xff] %v1463
        %1496 = vst [vmem:[%s245 + $0xb8] sm:$0xff] %v1464
        %1497 = vst [vmem:[%s245 + $0xc0] sm:$0xff] %v1465
        %1498 = vst [vmem:[%s245 + $0xc8] sm:$0xff] %v1466
        %1499 = vst [vmem:[%s245 + $0xd0] sm:$0xff] %v1467
        %1500 = vst [vmem:[%s245 + $0xd8] sm:$0xff] %v1468
        %1501 = vst [vmem:[%s245 + $0xe0] sm:$0xff] %v1469
        %1502 = vst [vmem:[%s245 + $0xe8] sm:$0xff] %v1470
        %1503 = vst [vmem:[%s245 + $0xf0] sm:$0xff] %v1471
        %1504 = vst [vmem:[%s245 + $0xf8] sm:$0xff] %v1472
        %s1505 = sand.u32 %s119, 1
        %s1506 = scalar_lea.sflag [#allocation4], %s1505
        %s1507 = sand.u32 %s119, 1
        %s1508 = smul.addr %s1507, 256
        %s1509 = scalar_lea.vmem [#allocation8], %s1508
        // Predicated region
        $region49: #{tpu_custom_call.1} parent=35 // pred_check
          %p1510 = pneg %p129
        $region50: #{tpu_custom_call.1} parent=35 // pred_check_branch
          %1512 = sbr.rel (%p1510) target = $region52
        $region51: #{tpu_custom_call.1} parent=35 // pred_region
          %s1513 = smul.u32 32, %s22
          %s1515 = ssub.s32 4096, 4096
          %1516 = vsyncadd %s1506, %s1515
          %s1517 = smul.addr %s1513, 128
          %s1518 = scalar_lea.hbm %s4, %s1517
          %s1519 = sshll.u32 %s1509, 4
          %s1520 = int_to_ptr.vmem [resolvable:$true] %s1519
          %1525 = dma.vmem_to_hbm [thread:$0]  %s1520, 4096, %s1518, %s1506, 128, 128, 8
        $region52: #{tpu_custom_call.1} parent=35 // pred_fallthru
          _
      $region36: #{tpu_custom_call.1} parent=5 // pred_fallthru
        _
      %p1526 = scmp.le.s32.totalorder 2, %s17
      // Predicated region
      $region53: #{tpu_custom_call.1} parent=5 // pred_check
        %p1527 = pneg %p1526
      $region54: #{tpu_custom_call.1} parent=5 // pred_check_branch
        %1529 = sbr.rel (%p1527) target = $region56
      $region55: #{tpu_custom_call.1} parent=5 // pred_region
        %s1530 = ssub.s32 %s17, 2
        // Predicated region
        $region57: #{tpu_custom_call.1} parent=55 // pred_check
          %p1531 = pneg %p135
        $region58: #{tpu_custom_call.1} parent=55 // pred_check_branch
          %1533 = sbr.rel (%p1531) target = $region60
        $region59: #{tpu_custom_call.1} parent=55 // pred_region
          %s1534 = sand.u32 %s120, 1
          %s1535 = scalar_lea.sflag [#allocation4], %s1534
          %s1536 = sand.u32 %s120, 1
          %s1537 = smul.addr %s1536, 256
          %s1538 = scalar_lea.vmem [#allocation8], %s1537
          %1539 = dma.done %s1535, 4096
        $region60: #{tpu_custom_call.1} parent=55 // pred_fallthru
          _
      $region56: #{tpu_custom_call.1} parent=5 // pred_fallthru
        _
    $region6: #{tpu_custom_call.1} parent=1 // loop_footer
      %s21 = sadd.s32 1, %s17
    $region7: #{tpu_custom_call.1} parent=1 // loop_footer_branch
      %16 = sbr.rel target = $region3
    $region8: #{tpu_custom_call.1} parent=1 // loop_exit
      _
    %1540 = vsyncpa [#allocation3], 1
    %s1541 = scalar_lea.sflag [#allocation3], 1
    %1542 = vsyncpa %s1541, 1
    %1543 = vsyncpa [#allocation6], 1
    %1544 = vsyncpa [#allocation4], 1
    %s1545 = scalar_lea.sflag [#allocation4], 1
    %1546 = vsyncpa %s1545, 1

</llo_original>
